<compile_context>
chip_gen: v7x
topology: tpu7x:2x2x1
jax: 0.10.0
libtpu: 0.0.40
codegen_flags: <defaults>
</compile_context>

<pallas_src>
import math
import functools

import jax
import jax.numpy as jnp
from jax.experimental import pallas as pl
from jax.experimental.pallas import tpu as pltpu


# ---------------------------------------------------------------------------
# Kernel
# ---------------------------------------------------------------------------
def mha_kernel(xq_ref, xkv_ref, wq_ref, wk_ref, wv_ref, wp_ref, o_ref,
               k_scr, v_scr, *, block_k, compute_dtype, approx_recip):
    H, N, K = k_scr.shape
    V = v_scr.shape[2]
    TQ = xq_ref.shape[1]
    cd = compute_dtype

    # ---- K/V projection: hoisted -- runs once per batch row (qi == 0) ------
    @pl.when(pl.program_id(1) == 0)
    def _project_kv():
        xkv = xkv_ref[0].astype(cd)                                     # (N, D)
        k2 = jnp.dot(xkv, wk_ref[...],
                     preferred_element_type=jnp.float32).astype(cd)     # (N, H*K)
        v2 = jnp.dot(xkv, wv_ref[...],
                     preferred_element_type=jnp.float32).astype(cd)     # (N, H*V)
        k_scr[...] = jnp.stack([k2[:, h * K:(h + 1) * K] for h in range(H)], axis=0)
        v_scr[...] = jnp.stack([v2[:, h * V:(h + 1) * V] for h in range(H)], axis=0)

    # ---- Q projection: one full-width matmul (scale pre-folded into Wq) ----
    xq = xq_ref[0]                                                      # (TQ, D)
    q2 = jnp.dot(xq.astype(cd), wq_ref[...],
                 preferred_element_type=jnp.float32).astype(cd)         # (TQ, H*K)
    q = jnp.stack([q2[:, h * K:(h + 1) * K] for h in range(H)], axis=0)  # (H, TQ, K)

    num_k = N // block_k

    if num_k <= 1:
        # Single pass: whole key axis in one chunk (small N).
        s = jnp.einsum('hqk,hnk->hqn', q, k_scr[...],
                       preferred_element_type=jnp.float32)              # (H, TQ, N)
        m = jnp.max(s, axis=-1, keepdims=True)
        p = jnp.exp(s - m)
        l = jnp.sum(p, axis=-1, keepdims=True)
        acc = jnp.einsum('hqn,hnv->hqv', p.astype(cd), v_scr[...],
                         preferred_element_type=jnp.float32)            # (H, TQ, V)
    else:
        # Flash-style online softmax over key chunks of the resident scratch;
        # bounds f32 intermediates to O(H*TQ*block_k).
        def body(i, carry):
            m, l, acc = carry
            start = pl.multiple_of(i * block_k, block_k)
            kc = k_scr[:, pl.ds(start, block_k), :]                     # (H, TK, K)
            vc = v_scr[:, pl.ds(start, block_k), :]                     # (H, TK, V)
            s = jnp.einsum('hqk,hnk->hqn', q, kc,
                           preferred_element_type=jnp.float32)          # (H, TQ, TK)
            m_new = jnp.maximum(m, jnp.max(s, axis=-1, keepdims=True))
            alpha = jnp.exp(m - m_new)
            p = jnp.exp(s - m_new)
            l_new = alpha * l + jnp.sum(p, axis=-1, keepdims=True)
            acc_new = alpha * acc + jnp.einsum(
                'hqn,hnv->hqv', p.astype(cd), vc,
                preferred_element_type=jnp.float32)
            return m_new, l_new, acc_new

        carry0 = (jnp.full((H, TQ, 1), -jnp.inf, jnp.float32),
                  jnp.zeros((H, TQ, 1), jnp.float32),
                  jnp.zeros((H, TQ, V), jnp.float32))
        m, l, acc = jax.lax.fori_loop(0, num_k, body, carry0,
                                      unroll=(num_k <= 4))

    # ---- Normalize (EUP reciprocal), fuse heads, fused output projection ---
    # NOTE: approx reciprocal adds ~2^-12 relative error to the row sums; it is
    # only enabled on the bf16 compute path.
    ctx = acc * pl.reciprocal(l, approx=approx_recip)                   # (H, TQ, V) f32
    ctx2 = jnp.concatenate([ctx[h] for h in range(H)], axis=-1).astype(cd)  # (TQ, H*V)
    proj = jnp.dot(ctx2, wp_ref[...],
                   preferred_element_type=jnp.float32)                  # (TQ, D)
    o_ref[0] = (xq.astype(jnp.float32) + proj).astype(o_ref.dtype)


# ---------------------------------------------------------------------------
# Host-side helpers
# ---------------------------------------------------------------------------
def prepare_weights(wq, wk, wv, wp, *, d_key, d_value, num_heads,
                    compute_dtype=jnp.bfloat16):
    """Pre-pack PyTorch (out, in) Linear weights for the fused kernel layout.

    Done once outside the hot path:
      wq (K*H, D) -> (D, H*K)  with 1/sqrt(K) folded in,
      wk (K*H, D) -> (D, H*K),
      wv (D, D)   -> (D, H*V),
      wp (D, D)   -> (H*V, D).
    Column order matches the head concatenation in the PyTorch forward.
    """
    scale = 1.0 / math.sqrt(d_key)
    cd = compute_dtype
    wq_p = (wq.T * scale).astype(cd)
    wk_p = wk.T.astype(cd)
    wv_p = wv.T.astype(cd)
    wp_p = wp.T.astype(cd)
    return wq_p, wk_p, wv_p, wp_p


def _vmem_capacity_bytes():
    try:
        return int(pltpu.get_tpu_info().vmem_capacity_bytes)
    except Exception:
        return 128 << 20


def _pick_block_q(n, max_block):
    for cand in (max_block, 512, 256, 128, 64, 32, 16, 8):
        if cand <= max_block and cand <= n and n % cand == 0 and cand % 8 == 0:
            return cand
    return n


def _pick_block_k(n, max_block):
    for cand in (max_block, 512, 256, 128):
        if cand <= max_block and cand <= n and n % cand == 0 and cand % 128 == 0:
            return cand
    return n


def _vmem_limit_bytes(N, TQ, TK, D, K, V, H, x_bytes, w_bytes, cd_bytes, cap):
    lane = lambda c: -(-c // 128) * 128
    blocks = (2 * TQ * D + 2 * N * D + 2 * TQ * D) * x_bytes     # xq / xkv / out (2x buffered)
    weights = (2 * D * H * K + 2 * D * D) * w_bytes              # wq+wk, wv+wp (1x buffered)
    kv_scr = H * N * (lane(K) + lane(V)) * cd_bytes              # resident K/V scratch
    interm = 4 * (TQ * D + N * D + TQ * D                        # q2, xkv cast, proj
                  + H * TQ * (lane(K) + 3 * TK + lane(V) + 256))  # q, s/p, acc, m/l
    est = blocks + weights + kv_scr + interm
    return int(max(16 << 20, min(int(1.5 * est), int(0.8 * cap))))


def multi_head_attention(x, packed_weights, *, d_key, d_value, num_heads,
                         compute_dtype=jnp.bfloat16, block_q=None, block_k=None):
    """x: (B, N, D) or (N, D); packed_weights from prepare_weights()."""
    squeeze = x.ndim == 2
    if squeeze:
        x = x[None]
    wq_p, wk_p, wv_p, wp_p = packed_weights

    B, N, D = x.shape
    K, V, H = d_key, d_value, num_heads
    assert D == V * H

    cap = _vmem_capacity_bytes()
    if block_q is None:                       # generation-aware query tile
        if cap >= 96 << 20:                   # 128 MiB parts (v5e / v6e)
            block_q = 512 if N <= 1024 else 256
        else:                                 # 64 MiB parts (v7x)
            block_q = 128
    if block_k is None:
        block_k = 512
    TQ = _pick_block_q(N, block_q)
    TK = _pick_block_k(N, block_k)

    approx = jnp.dtype(compute_dtype) == jnp.dtype(jnp.bfloat16)
    kernel = functools.partial(mha_kernel, block_k=TK,
                               compute_dtype=compute_dtype,
                               approx_recip=approx)

    vmem_limit = _vmem_limit_bytes(
        N, TQ, TK, D, K, V, H,
        jnp.dtype(x.dtype).itemsize, jnp.dtype(wq_p.dtype).itemsize,
        jnp.dtype(compute_dtype).itemsize, cap)

    grid = (B, N // TQ)

    def _call(use_buffered):
        def w_spec(shape):
            if use_buffered:
                # Constant index_map -> single buffering halves weight VMEM.
                return pl.BlockSpec(shape, lambda b, qi: (0, 0),
                                    pipeline_mode=pl.Buffered(1))
            return pl.BlockSpec(shape, lambda b, qi: (0, 0))

        return pl.pallas_call(
            kernel,
            out_shape=jax.ShapeDtypeStruct((B, N, D), x.dtype),
            grid=grid,
            in_specs=[
                pl.BlockSpec((1, TQ, D), lambda b, qi: (b, qi, 0)),  # query / residual tile
                pl.BlockSpec((1, N, D), lambda b, qi: (b, 0, 0)),    # full sequence for K/V
                w_spec((D, H * K)),                                  # Wq (scale folded in)
                w_spec((D, H * K)),                                  # Wk
                w_spec((D, H * V)),                                  # Wv
                w_spec((H * V, D)),                                  # Wp
            ],
            out_specs=pl.BlockSpec((1, TQ, D), lambda b, qi: (b, qi, 0)),
            scratch_shapes=[
                pltpu.VMEM((H, N, K), compute_dtype),                # resident K heads
                pltpu.VMEM((H, N, V), compute_dtype),                # resident V heads
            ],
            compiler_params=pltpu.CompilerParams(
                # qi must be sequential ("arbitrary") so the pl.when(qi==0)
                # K/V projection precedes every query tile of that batch row.
                dimension_semantics=("parallel", "arbitrary"),
                vmem_limit_bytes=vmem_limit),
        )(x, x, wq_p, wk_p, wv_p, wp_p)

    try:
        out = jax.block_until_ready(_call(True))
    except Exception:
        # pipeline_mode=pl.Buffered(1) not supported by this jax/Mosaic build;
        # fall back to default double buffering (correctness unchanged).
        out = jax.block_until_ready(_call(False))
    return out[0] if squeeze else out


# ---------------------------------------------------------------------------
# Literal JAX transcription of the PyTorch forward (verification reference)
# ---------------------------------------------------------------------------
def reference_forward(x, wq, wk, wv, wp, *, d_key, d_value, num_heads):
    K, V, H = d_key, d_value, num_heads
    B, N, D = x.shape
    scale = 1.0 / math.sqrt(K)
    q = x @ wq.T
    k = x @ wk.T
    v = x @ wv.T
    q_vert = jnp.concatenate([q[..., i:i + K] for i in range(0, K * H, K)], axis=1)
    k_horiz = jnp.concatenate(
        [jnp.swapaxes(k, 1, 2)[..., i:i + K, :] for i in range(0, K * H, K)], axis=2)
    dot_big = q_vert @ k_horiz                                   # (B, N*H, N*H)
    masked = jnp.full_like(dot_big, -jnp.inf)
    for i in range(0, N * H, N):
        masked = masked.at[..., i:i + N, i:i + N].set(dot_big[..., i:i + N, i:i + N])
    sm = jax.nn.softmax(masked * scale, axis=2)
    v_vert = jnp.concatenate([v[..., i:i + V] for i in range(0, V * H, V)], axis=1)
    attn_vert = sm @ v_vert
    attn = jnp.concatenate([attn_vert[..., i:i + N, :] for i in range(0, N * H, N)], axis=2)
    return x + attn @ wp.T


# ---------------------------------------------------------------------------
# Demo / self-test
# ---------------------------------------------------------------------------
if __name__ == "__main__":
    def run_case(name, B, N, d_key, d_value, num_heads, compute_dtype, w_scale,
                 atol, rtol, block_q=None, block_k=None):
        d_model = d_value * num_heads
        key = jax.random.PRNGKey(0)
        kx, kq, kk, kv, kp = jax.random.split(key, 5)
        x = jax.random.normal(kx, (B, N, d_model), dtype=jnp.float32)
        # PyTorch Linear weights: (out_features, in_features), no bias.
        wq = w_scale * jax.random.normal(kq, (d_key * num_heads, d_model), jnp.float32)
        wk = w_scale * jax.random.normal(kk, (d_key * num_heads, d_model), jnp.float32)
        wv = w_scale * jax.random.normal(kv, (d_model, d_model), jnp.float32)
        wp = w_scale * jax.random.normal(kp, (d_model, d_model), jnp.float32)

        packed = prepare_weights(wq, wk, wv, wp, d_key=d_key, d_value=d_value,
                                 num_heads=num_heads, compute_dtype=compute_dtype)
        y = multi_head_attention(x, packed, d_key=d_key, d_value=d_value,
                                 num_heads=num_heads, compute_dtype=compute_dtype,
                                 block_q=block_q, block_k=block_k)
        y = jax.block_until_ready(y)

        y_ref = reference_forward(x, wq, wk, wv, wp, d_key=d_key,
                                  d_value=d_value, num_heads=num_heads)
        assert y.shape == x.shape, f"{name}: bad shape {y.shape}"
        assert jnp.allclose(y, y_ref, atol=atol, rtol=rtol), \
            f"{name}: mismatch vs reference"

    # Tiny config (matches the original PyTorch demo scale) on the exact f32
    # single-pass path.
    run_case("tiny_f32", B=2, N=8, d_key=4, d_value=4, num_heads=2,
             compute_dtype=jnp.float32, w_scale=0.2, atol=1e-5, rtol=1e-5)

    # TPU-shaped config exercising the query-tile grid axis (grid=(2, 2), so
    # the pl.when K/V hoist is reused across tiles), the flash-style key-chunk
    # loop (num_k=2), and the bf16-MXU fast path vs the f32 reference.
    run_case("tiled_bf16", B=2, N=256, d_key=64, d_value=64, num_heads=2,
             compute_dtype=jnp.bfloat16, w_scale=1.0 / math.sqrt(128),
             atol=5e-2, rtol=5e-2, block_q=128, block_k=128)

    print("KERNEL_OK")
</pallas_src>

<mosaic_0001>
module attributes {stable_mosaic.version = 11 : i64} {
  func.func @mha_kernel(%arg0: i32, %arg1: i32, %arg2: memref<1x8x8xf32, #tpu.memory_space<vmem>>, %arg3: memref<1x8x8xf32, #tpu.memory_space<vmem>>, %arg4: memref<8x8xf32, #tpu.memory_space<vmem>>, %arg5: memref<8x8xf32, #tpu.memory_space<vmem>>, %arg6: memref<8x8xf32, #tpu.memory_space<vmem>>, %arg7: memref<8x8xf32, #tpu.memory_space<vmem>>, %arg8: memref<1x8x8xf32, #tpu.memory_space<vmem>>, %arg9: memref<2x8x4xf32, #tpu.memory_space<vmem>>, %arg10: memref<2x8x4xf32, #tpu.memory_space<vmem>>) attributes {dimension_semantics = [#tpu.dimension_semantics<parallel>, #tpu.dimension_semantics<arbitrary>], iteration_bounds = array<i64: 2, 1>, scalar_prefetch = 0 : i64, scratch_operands = 2 : i64, tpu.core_type = #tpu.core_type<tc>, window_params = [{transform_indices = @transform_0, window_bounds = array<i64: 1, 8, 8>}, {transform_indices = @transform_1, window_bounds = array<i64: 1, 8, 8>}, {pipeline_mode = #tpu.pipeline_mode<synchronous>, transform_indices = @transform_2, window_bounds = array<i64: 8, 8>}, {pipeline_mode = #tpu.pipeline_mode<synchronous>, transform_indices = @transform_3, window_bounds = array<i64: 8, 8>}, {pipeline_mode = #tpu.pipeline_mode<synchronous>, transform_indices = @transform_4, window_bounds = array<i64: 8, 8>}, {pipeline_mode = #tpu.pipeline_mode<synchronous>, transform_indices = @transform_5, window_bounds = array<i64: 8, 8>}, {transform_indices = @transform_6, window_bounds = array<i64: 1, 8, 8>}]} {
    %c0_i32 = arith.constant 0 : i32
    %0 = arith.cmpi eq, %arg1, %c0_i32 : i32
    %1 = arith.extui %0 : i1 to i32
    %c0_i32_0 = arith.constant 0 : i32
    %2 = arith.cmpi ne, %1, %c0_i32_0 : i32
    scf.if %2 {
      %c0_21 = arith.constant 0 : index
      %c0_22 = arith.constant 0 : index
      %c0_23 = arith.constant 0 : index
      %37 = vector.load %arg3[%c0_21, %c0_22, %c0_23] : memref<1x8x8xf32, #tpu.memory_space<vmem>>, vector<1x8x8xf32>
      %38 = vector.shape_cast %37 : vector<1x8x8xf32> to vector<8x8xf32>
      %c0_24 = arith.constant 0 : index
      %c0_25 = arith.constant 0 : index
      %39 = vector.load %arg5[%c0_24, %c0_25] : memref<8x8xf32, #tpu.memory_space<vmem>>, vector<8x8xf32>
      %cst_26 = arith.constant dense<0.000000e+00> : vector<8x8xf32>
      %40 = tpu.matmul %38, %39, %cst_26 {dimension_numbers = #tpu.dot_dimension_numbers<[1], [0], [0], [1], [0, 0, 1, 1], [], []>} : vector<8x8xf32>, vector<8x8xf32>, vector<8x8xf32> -> vector<8x8xf32>
      %c0_27 = arith.constant 0 : index
      %c0_28 = arith.constant 0 : index
      %41 = vector.load %arg6[%c0_27, %c0_28] : memref<8x8xf32, #tpu.memory_space<vmem>>, vector<8x8xf32>
      %cst_29 = arith.constant dense<0.000000e+00> : vector<8x8xf32>
      %42 = tpu.matmul %38, %41, %cst_29 {dimension_numbers = #tpu.dot_dimension_numbers<[1], [0], [0], [1], [0, 0, 1, 1], [], []>} : vector<8x8xf32>, vector<8x8xf32>, vector<8x8xf32> -> vector<8x8xf32>
      %43 = vector.extract_strided_slice %40 {offsets = [0, 0], sizes = [8, 4], strides = [1, 1]} : vector<8x8xf32> to vector<8x4xf32>
      %44 = vector.extract_strided_slice %40 {offsets = [0, 4], sizes = [8, 4], strides = [1, 1]} : vector<8x8xf32> to vector<8x4xf32>
      %45 = vector.shape_cast %43 : vector<8x4xf32> to vector<1x8x4xf32>
      %46 = vector.shape_cast %44 : vector<8x4xf32> to vector<1x8x4xf32>
      %47 = tpu.concatenate %45, %46 in 0 : vector<1x8x4xf32>, vector<1x8x4xf32> -> vector<2x8x4xf32>
      %c0_30 = arith.constant 0 : index
      %c0_31 = arith.constant 0 : index
      %c0_32 = arith.constant 0 : index
      %48 = vector.load %arg9[%c0_30, %c0_31, %c0_32] : memref<2x8x4xf32, #tpu.memory_space<vmem>>, vector<2x8x4xf32>
      tpu.vector_store %arg9[%c0_30, %c0_31, %c0_32], %47 {strides = array<i32>} : memref<2x8x4xf32, #tpu.memory_space<vmem>>, vector<2x8x4xf32>,
      %49 = vector.extract_strided_slice %42 {offsets = [0, 0], sizes = [8, 4], strides = [1, 1]} : vector<8x8xf32> to vector<8x4xf32>
      %50 = vector.extract_strided_slice %42 {offsets = [0, 4], sizes = [8, 4], strides = [1, 1]} : vector<8x8xf32> to vector<8x4xf32>
      %51 = vector.shape_cast %49 : vector<8x4xf32> to vector<1x8x4xf32>
      %52 = vector.shape_cast %50 : vector<8x4xf32> to vector<1x8x4xf32>
      %53 = tpu.concatenate %51, %52 in 0 : vector<1x8x4xf32>, vector<1x8x4xf32> -> vector<2x8x4xf32>
      %c0_33 = arith.constant 0 : index
      %c0_34 = arith.constant 0 : index
      %c0_35 = arith.constant 0 : index
      %54 = vector.load %arg10[%c0_33, %c0_34, %c0_35] : memref<2x8x4xf32, #tpu.memory_space<vmem>>, vector<2x8x4xf32>
      tpu.vector_store %arg10[%c0_33, %c0_34, %c0_35], %53 {strides = array<i32>} : memref<2x8x4xf32, #tpu.memory_space<vmem>>, vector<2x8x4xf32>,
    } else {
    }
    %c0 = arith.constant 0 : index
    %c0_1 = arith.constant 0 : index
    %c0_2 = arith.constant 0 : index
    %3 = vector.load %arg2[%c0, %c0_1, %c0_2] : memref<1x8x8xf32, #tpu.memory_space<vmem>>, vector<1x8x8xf32>
    %4 = vector.shape_cast %3 : vector<1x8x8xf32> to vector<8x8xf32>
    %c0_3 = arith.constant 0 : index
    %c0_4 = arith.constant 0 : index
    %5 = vector.load %arg4[%c0_3, %c0_4] : memref<8x8xf32, #tpu.memory_space<vmem>>, vector<8x8xf32>
    %cst = arith.constant dense<0.000000e+00> : vector<8x8xf32>
    %6 = tpu.matmul %4, %5, %cst {dimension_numbers = #tpu.dot_dimension_numbers<[1], [0], [0], [1], [0, 0, 1, 1], [], []>} : vector<8x8xf32>, vector<8x8xf32>, vector<8x8xf32> -> vector<8x8xf32>
    %7 = vector.extract_strided_slice %6 {offsets = [0, 0], sizes = [8, 4], strides = [1, 1]} : vector<8x8xf32> to vector<8x4xf32>
    %8 = vector.extract_strided_slice %6 {offsets = [0, 4], sizes = [8, 4], strides = [1, 1]} : vector<8x8xf32> to vector<8x4xf32>
    %9 = vector.shape_cast %7 : vector<8x4xf32> to vector<1x8x4xf32>
    %10 = vector.shape_cast %8 : vector<8x4xf32> to vector<1x8x4xf32>
    %11 = tpu.concatenate %9, %10 in 0 : vector<1x8x4xf32>, vector<1x8x4xf32> -> vector<2x8x4xf32>
    %c0_5 = arith.constant 0 : index
    %c0_6 = arith.constant 0 : index
    %c0_7 = arith.constant 0 : index
    %12 = vector.load %arg9[%c0_5, %c0_6, %c0_7] : memref<2x8x4xf32, #tpu.memory_space<vmem>>, vector<2x8x4xf32>
    "tpu.trace_start"() <{level = 10 : i32, message = "hqk,hnk->hqn"}> : () -> ()
    %cst_8 = arith.constant dense<0.000000e+00> : vector<2x8x8xf32>
    %13 = tpu.matmul %11, %12, %cst_8 {dimension_numbers = #tpu.dot_dimension_numbers<[2], [2], [1], [1], [0, 0, 0, 1, 1, 1], [0], [0]>} : vector<2x8x4xf32>, vector<2x8x4xf32>, vector<2x8x8xf32> -> vector<2x8x8xf32>
    "tpu.trace_stop"() : () -> ()
    %cst_9 = arith.constant dense<0xFF800000> : vector<2x8xf32>
    %14 = vector.multi_reduction <maximumf>, %13, %cst_9 [2] : vector<2x8x8xf32> to vector<2x8xf32>
    %15 = vector.shape_cast %14 : vector<2x8xf32> to vector<2x8x1xf32>
    %16 = vector.broadcast %15 : vector<2x8x1xf32> to vector<2x8x8xf32>
    %17 = arith.subf %13, %16 : vector<2x8x8xf32>
    %18 = math.exp %17 : vector<2x8x8xf32>
    %cst_10 = arith.constant dense<0.000000e+00> : vector<2x8xf32>
    %19 = vector.multi_reduction <add>, %18, %cst_10 [2] : vector<2x8x8xf32> to vector<2x8xf32>
    %20 = vector.shape_cast %19 : vector<2x8xf32> to vector<2x8x1xf32>
    %c0_11 = arith.constant 0 : index
    %c0_12 = arith.constant 0 : index
    %c0_13 = arith.constant 0 : index
    %21 = vector.load %arg10[%c0_11, %c0_12, %c0_13] : memref<2x8x4xf32, #tpu.memory_space<vmem>>, vector<2x8x4xf32>
    "tpu.trace_start"() <{level = 10 : i32, message = "hqn,hnv->hqv"}> : () -> ()
    %cst_14 = arith.constant dense<0.000000e+00> : vector<2x8x4xf32>
    %22 = tpu.matmul %18, %21, %cst_14 {dimension_numbers = #tpu.dot_dimension_numbers<[2], [1], [1], [2], [0, 0, 0, 1, 1, 2], [0], [0]>} : vector<2x8x8xf32>, vector<2x8x4xf32>, vector<2x8x4xf32> -> vector<2x8x4xf32>
    "tpu.trace_stop"() : () -> ()
    %23 = tpu.reciprocal %20 : vector<2x8x1xf32> -> vector<2x8x1xf32>
    %24 = vector.broadcast %23 : vector<2x8x1xf32> to vector<2x8x4xf32>
    %25 = arith.mulf %22, %24 : vector<2x8x4xf32>
    %26 = vector.extract_strided_slice %25 {offsets = [0, 0, 0], sizes = [1, 8, 4], strides = [1, 1, 1]} : vector<2x8x4xf32> to vector<1x8x4xf32>
    %27 = vector.shape_cast %26 : vector<1x8x4xf32> to vector<8x4xf32>
    %28 = vector.extract_strided_slice %25 {offsets = [1, 0, 0], sizes = [1, 8, 4], strides = [1, 1, 1]} : vector<2x8x4xf32> to vector<1x8x4xf32>
    %29 = vector.shape_cast %28 : vector<1x8x4xf32> to vector<8x4xf32>
    %30 = tpu.concatenate %27, %29 in 1 : vector<8x4xf32>, vector<8x4xf32> -> vector<8x8xf32>
    %c0_15 = arith.constant 0 : index
    %c0_16 = arith.constant 0 : index
    %31 = vector.load %arg7[%c0_15, %c0_16] : memref<8x8xf32, #tpu.memory_space<vmem>>, vector<8x8xf32>
    %cst_17 = arith.constant dense<0.000000e+00> : vector<8x8xf32>
    %32 = tpu.matmul %30, %31, %cst_17 {dimension_numbers = #tpu.dot_dimension_numbers<[1], [0], [0], [1], [0, 0, 1, 1], [], []>} : vector<8x8xf32>, vector<8x8xf32>, vector<8x8xf32> -> vector<8x8xf32>
    %33 = arith.addf %4, %32 : vector<8x8xf32>
    %c0_18 = arith.constant 0 : index
    %c0_19 = arith.constant 0 : index
    %c0_20 = arith.constant 0 : index
    %34 = vector.load %arg8[%c0_18, %c0_19, %c0_20] : memref<1x8x8xf32, #tpu.memory_space<vmem>>, vector<1x8x8xf32>
    %35 = vector.shape_cast %34 : vector<1x8x8xf32> to vector<8x8xf32>
    %36 = vector.shape_cast %33 : vector<8x8xf32> to vector<1x8x8xf32>
    tpu.vector_store %arg8[%c0_18, %c0_19, %c0_20], %36 {strides = array<i32>} : memref<1x8x8xf32, #tpu.memory_space<vmem>>, vector<1x8x8xf32>,
    return
  }
  func.func @transform_0(%arg0: i32, %arg1: i32) -> (i32, i32, i32) {
    %c0_i32 = arith.constant 0 : i32
    %c0_i32_0 = arith.constant 0 : i32
    return %arg0, %arg1, %c0_i32 : i32, i32, i32
  }
  func.func @transform_1(%arg0: i32, %arg1: i32) -> (i32, i32, i32) {
    %c0_i32 = arith.constant 0 : i32
    %c0_i32_0 = arith.constant 0 : i32
    %c0_i32_1 = arith.constant 0 : i32
    return %arg0, %c0_i32, %c0_i32_0 : i32, i32, i32
  }
  func.func @transform_2(%arg0: i32, %arg1: i32) -> (i32, i32) {
    %c0_i32 = arith.constant 0 : i32
    %c0_i32_0 = arith.constant 0 : i32
    %c0_i32_1 = arith.constant 0 : i32
    return %c0_i32, %c0_i32_0 : i32, i32
  }
  func.func @transform_3(%arg0: i32, %arg1: i32) -> (i32, i32) {
    %c0_i32 = arith.constant 0 : i32
    %c0_i32_0 = arith.constant 0 : i32
    %c0_i32_1 = arith.constant 0 : i32
    return %c0_i32, %c0_i32_0 : i32, i32
  }
  func.func @transform_4(%arg0: i32, %arg1: i32) -> (i32, i32) {
    %c0_i32 = arith.constant 0 : i32
    %c0_i32_0 = arith.constant 0 : i32
    %c0_i32_1 = arith.constant 0 : i32
    return %c0_i32, %c0_i32_0 : i32, i32
  }
  func.func @transform_5(%arg0: i32, %arg1: i32) -> (i32, i32) {
    %c0_i32 = arith.constant 0 : i32
    %c0_i32_0 = arith.constant 0 : i32
    %c0_i32_1 = arith.constant 0 : i32
    return %c0_i32, %c0_i32_0 : i32, i32
  }
  func.func @transform_6(%arg0: i32, %arg1: i32) -> (i32, i32, i32) {
    %c0_i32 = arith.constant 0 : i32
    %c0_i32_0 = arith.constant 0 : i32
    return %arg0, %arg1, %c0_i32 : i32, i32, i32
  }
}

module attributes {stable_mosaic.version = 11 : i64} {
  func.func @mha_kernel(%arg0: i32, %arg1: i32, %arg2: memref<1x8x8xf32, #tpu.memory_space<vmem>>, %arg3: memref<1x8x8xf32, #tpu.memory_space<vmem>>, %arg4: memref<8x8xf32, #tpu.memory_space<vmem>>, %arg5: memref<8x8xf32, #tpu.memory_space<vmem>>, %arg6: memref<8x8xf32, #tpu.memory_space<vmem>>, %arg7: memref<8x8xf32, #tpu.memory_space<vmem>>, %arg8: memref<1x8x8xf32, #tpu.memory_space<vmem>>, %arg9: memref<2x8x4xf32, #tpu.memory_space<vmem>>, %arg10: memref<2x8x4xf32, #tpu.memory_space<vmem>>) attributes {dimension_semantics = [#tpu.dimension_semantics<parallel>, #tpu.dimension_semantics<arbitrary>], iteration_bounds = array<i64: 2, 1>, scalar_prefetch = 0 : i64, scratch_operands = 2 : i64, tpu.core_type = #tpu.core_type<tc>, window_params = [{transform_indices = @transform_0, window_bounds = array<i64: 1, 8, 8>}, {transform_indices = @transform_1, window_bounds = array<i64: 1, 8, 8>}, {pipeline_mode = #tpu.pipeline_mode<synchronous>, transform_indices = @transform_2, window_bounds = array<i64: 8, 8>}, {pipeline_mode = #tpu.pipeline_mode<synchronous>, transform_indices = @transform_3, window_bounds = array<i64: 8, 8>}, {pipeline_mode = #tpu.pipeline_mode<synchronous>, transform_indices = @transform_4, window_bounds = array<i64: 8, 8>}, {pipeline_mode = #tpu.pipeline_mode<synchronous>, transform_indices = @transform_5, window_bounds = array<i64: 8, 8>}, {transform_indices = @transform_6, window_bounds = array<i64: 1, 8, 8>}]} {
    %c0_i32 = arith.constant 0 : i32
    %0 = arith.cmpi eq, %arg1, %c0_i32 : i32
    %1 = arith.extui %0 : i1 to i32
    %c0_i32_0 = arith.constant 0 : i32
    %2 = arith.cmpi ne, %1, %c0_i32_0 : i32
    scf.if %2 {
      %c0_21 = arith.constant 0 : index
      %c0_22 = arith.constant 0 : index
      %c0_23 = arith.constant 0 : index
      %37 = vector.load %arg3[%c0_21, %c0_22, %c0_23] : memref<1x8x8xf32, #tpu.memory_space<vmem>>, vector<1x8x8xf32>
      %38 = vector.shape_cast %37 : vector<1x8x8xf32> to vector<8x8xf32>
      %c0_24 = arith.constant 0 : index
      %c0_25 = arith.constant 0 : index
      %39 = vector.load %arg5[%c0_24, %c0_25] : memref<8x8xf32, #tpu.memory_space<vmem>>, vector<8x8xf32>
      %cst_26 = arith.constant dense<0.000000e+00> : vector<8x8xf32>
      %40 = tpu.matmul %38, %39, %cst_26 {dimension_numbers = #tpu.dot_dimension_numbers<[1], [0], [0], [1], [0, 0, 1, 1], [], []>} : vector<8x8xf32>, vector<8x8xf32>, vector<8x8xf32> -> vector<8x8xf32>
      %c0_27 = arith.constant 0 : index
      %c0_28 = arith.constant 0 : index
      %41 = vector.load %arg6[%c0_27, %c0_28] : memref<8x8xf32, #tpu.memory_space<vmem>>, vector<8x8xf32>
      %cst_29 = arith.constant dense<0.000000e+00> : vector<8x8xf32>
      %42 = tpu.matmul %38, %41, %cst_29 {dimension_numbers = #tpu.dot_dimension_numbers<[1], [0], [0], [1], [0, 0, 1, 1], [], []>} : vector<8x8xf32>, vector<8x8xf32>, vector<8x8xf32> -> vector<8x8xf32>
      %43 = vector.extract_strided_slice %40 {offsets = [0, 0], sizes = [8, 4], strides = [1, 1]} : vector<8x8xf32> to vector<8x4xf32>
      %44 = vector.extract_strided_slice %40 {offsets = [0, 4], sizes = [8, 4], strides = [1, 1]} : vector<8x8xf32> to vector<8x4xf32>
      %45 = vector.shape_cast %43 : vector<8x4xf32> to vector<1x8x4xf32>
      %46 = vector.shape_cast %44 : vector<8x4xf32> to vector<1x8x4xf32>
      %47 = tpu.concatenate %45, %46 in 0 : vector<1x8x4xf32>, vector<1x8x4xf32> -> vector<2x8x4xf32>
      %c0_30 = arith.constant 0 : index
      %c0_31 = arith.constant 0 : index
      %c0_32 = arith.constant 0 : index
      %48 = vector.load %arg9[%c0_30, %c0_31, %c0_32] : memref<2x8x4xf32, #tpu.memory_space<vmem>>, vector<2x8x4xf32>
      tpu.vector_store %arg9[%c0_30, %c0_31, %c0_32], %47 {strides = array<i32>} : memref<2x8x4xf32, #tpu.memory_space<vmem>>, vector<2x8x4xf32>,
      %49 = vector.extract_strided_slice %42 {offsets = [0, 0], sizes = [8, 4], strides = [1, 1]} : vector<8x8xf32> to vector<8x4xf32>
      %50 = vector.extract_strided_slice %42 {offsets = [0, 4], sizes = [8, 4], strides = [1, 1]} : vector<8x8xf32> to vector<8x4xf32>
      %51 = vector.shape_cast %49 : vector<8x4xf32> to vector<1x8x4xf32>
      %52 = vector.shape_cast %50 : vector<8x4xf32> to vector<1x8x4xf32>
      %53 = tpu.concatenate %51, %52 in 0 : vector<1x8x4xf32>, vector<1x8x4xf32> -> vector<2x8x4xf32>
      %c0_33 = arith.constant 0 : index
      %c0_34 = arith.constant 0 : index
      %c0_35 = arith.constant 0 : index
      %54 = vector.load %arg10[%c0_33, %c0_34, %c0_35] : memref<2x8x4xf32, #tpu.memory_space<vmem>>, vector<2x8x4xf32>
      tpu.vector_store %arg10[%c0_33, %c0_34, %c0_35], %53 {strides = array<i32>} : memref<2x8x4xf32, #tpu.memory_space<vmem>>, vector<2x8x4xf32>,
    } else {
    }
    %c0 = arith.constant 0 : index
    %c0_1 = arith.constant 0 : index
    %c0_2 = arith.constant 0 : index
    %3 = vector.load %arg2[%c0, %c0_1, %c0_2] : memref<1x8x8xf32, #tpu.memory_space<vmem>>, vector<1x8x8xf32>
    %4 = vector.shape_cast %3 : vector<1x8x8xf32> to vector<8x8xf32>
    %c0_3 = arith.constant 0 : index
    %c0_4 = arith.constant 0 : index
    %5 = vector.load %arg4[%c0_3, %c0_4] : memref<8x8xf32, #tpu.memory_space<vmem>>, vector<8x8xf32>
    %cst = arith.constant dense<0.000000e+00> : vector<8x8xf32>
    %6 = tpu.matmul %4, %5, %cst {dimension_numbers = #tpu.dot_dimension_numbers<[1], [0], [0], [1], [0, 0, 1, 1], [], []>} : vector<8x8xf32>, vector<8x8xf32>, vector<8x8xf32> -> vector<8x8xf32>
    %7 = vector.extract_strided_slice %6 {offsets = [0, 0], sizes = [8, 4], strides = [1, 1]} : vector<8x8xf32> to vector<8x4xf32>
    %8 = vector.extract_strided_slice %6 {offsets = [0, 4], sizes = [8, 4], strides = [1, 1]} : vector<8x8xf32> to vector<8x4xf32>
    %9 = vector.shape_cast %7 : vector<8x4xf32> to vector<1x8x4xf32>
    %10 = vector.shape_cast %8 : vector<8x4xf32> to vector<1x8x4xf32>
    %11 = tpu.concatenate %9, %10 in 0 : vector<1x8x4xf32>, vector<1x8x4xf32> -> vector<2x8x4xf32>
    %c0_5 = arith.constant 0 : index
    %c0_6 = arith.constant 0 : index
    %c0_7 = arith.constant 0 : index
    %12 = vector.load %arg9[%c0_5, %c0_6, %c0_7] : memref<2x8x4xf32, #tpu.memory_space<vmem>>, vector<2x8x4xf32>
    "tpu.trace_start"() <{level = 10 : i32, message = "hqk,hnk->hqn"}> : () -> ()
    %cst_8 = arith.constant dense<0.000000e+00> : vector<2x8x8xf32>
    %13 = tpu.matmul %11, %12, %cst_8 {dimension_numbers = #tpu.dot_dimension_numbers<[2], [2], [1], [1], [0, 0, 0, 1, 1, 1], [0], [0]>} : vector<2x8x4xf32>, vector<2x8x4xf32>, vector<2x8x8xf32> -> vector<2x8x8xf32>
    "tpu.trace_stop"() : () -> ()
    %cst_9 = arith.constant dense<0xFF800000> : vector<2x8xf32>
    %14 = vector.multi_reduction <maximumf>, %13, %cst_9 [2] : vector<2x8x8xf32> to vector<2x8xf32>
    %15 = vector.shape_cast %14 : vector<2x8xf32> to vector<2x8x1xf32>
    %16 = vector.broadcast %15 : vector<2x8x1xf32> to vector<2x8x8xf32>
    %17 = arith.subf %13, %16 : vector<2x8x8xf32>
    %18 = math.exp %17 : vector<2x8x8xf32>
    %cst_10 = arith.constant dense<0.000000e+00> : vector<2x8xf32>
    %19 = vector.multi_reduction <add>, %18, %cst_10 [2] : vector<2x8x8xf32> to vector<2x8xf32>
    %20 = vector.shape_cast %19 : vector<2x8xf32> to vector<2x8x1xf32>
    %c0_11 = arith.constant 0 : index
    %c0_12 = arith.constant 0 : index
    %c0_13 = arith.constant 0 : index
    %21 = vector.load %arg10[%c0_11, %c0_12, %c0_13] : memref<2x8x4xf32, #tpu.memory_space<vmem>>, vector<2x8x4xf32>
    "tpu.trace_start"() <{level = 10 : i32, message = "hqn,hnv->hqv"}> : () -> ()
    %cst_14 = arith.constant dense<0.000000e+00> : vector<2x8x4xf32>
    %22 = tpu.matmul %18, %21, %cst_14 {dimension_numbers = #tpu.dot_dimension_numbers<[2], [1], [1], [2], [0, 0, 0, 1, 1, 2], [0], [0]>} : vector<2x8x8xf32>, vector<2x8x4xf32>, vector<2x8x4xf32> -> vector<2x8x4xf32>
    "tpu.trace_stop"() : () -> ()
    %23 = tpu.reciprocal %20 : vector<2x8x1xf32> -> vector<2x8x1xf32>
    %24 = vector.broadcast %23 : vector<2x8x1xf32> to vector<2x8x4xf32>
    %25 = arith.mulf %22, %24 : vector<2x8x4xf32>
    %26 = vector.extract_strided_slice %25 {offsets = [0, 0, 0], sizes = [1, 8, 4], strides = [1, 1, 1]} : vector<2x8x4xf32> to vector<1x8x4xf32>
    %27 = vector.shape_cast %26 : vector<1x8x4xf32> to vector<8x4xf32>
    %28 = vector.extract_strided_slice %25 {offsets = [1, 0, 0], sizes = [1, 8, 4], strides = [1, 1, 1]} : vector<2x8x4xf32> to vector<1x8x4xf32>
    %29 = vector.shape_cast %28 : vector<1x8x4xf32> to vector<8x4xf32>
    %30 = tpu.concatenate %27, %29 in 1 : vector<8x4xf32>, vector<8x4xf32> -> vector<8x8xf32>
    %c0_15 = arith.constant 0 : index
    %c0_16 = arith.constant 0 : index
    %31 = vector.load %arg7[%c0_15, %c0_16] : memref<8x8xf32, #tpu.memory_space<vmem>>, vector<8x8xf32>
    %cst_17 = arith.constant dense<0.000000e+00> : vector<8x8xf32>
    %32 = tpu.matmul %30, %31, %cst_17 {dimension_numbers = #tpu.dot_dimension_numbers<[1], [0], [0], [1], [0, 0, 1, 1], [], []>} : vector<8x8xf32>, vector<8x8xf32>, vector<8x8xf32> -> vector<8x8xf32>
    %33 = arith.addf %4, %32 : vector<8x8xf32>
    %c0_18 = arith.constant 0 : index
    %c0_19 = arith.constant 0 : index
    %c0_20 = arith.constant 0 : index
    %34 = vector.load %arg8[%c0_18, %c0_19, %c0_20] : memref<1x8x8xf32, #tpu.memory_space<vmem>>, vector<1x8x8xf32>
    %35 = vector.shape_cast %34 : vector<1x8x8xf32> to vector<8x8xf32>
    %36 = vector.shape_cast %33 : vector<8x8xf32> to vector<1x8x8xf32>
    tpu.vector_store %arg8[%c0_18, %c0_19, %c0_20], %36 {strides = array<i32>} : memref<1x8x8xf32, #tpu.memory_space<vmem>>, vector<1x8x8xf32>,
    return
  }
  func.func @transform_0(%arg0: i32, %arg1: i32) -> (i32, i32, i32) {
    %c0_i32 = arith.constant 0 : i32
    %c0_i32_0 = arith.constant 0 : i32
    return %arg0, %arg1, %c0_i32 : i32, i32, i32
  }
  func.func @transform_1(%arg0: i32, %arg1: i32) -> (i32, i32, i32) {
    %c0_i32 = arith.constant 0 : i32
    %c0_i32_0 = arith.constant 0 : i32
    %c0_i32_1 = arith.constant 0 : i32
    return %arg0, %c0_i32, %c0_i32_0 : i32, i32, i32
  }
  func.func @transform_2(%arg0: i32, %arg1: i32) -> (i32, i32) {
    %c0_i32 = arith.constant 0 : i32
    %c0_i32_0 = arith.constant 0 : i32
    %c0_i32_1 = arith.constant 0 : i32
    return %c0_i32, %c0_i32_0 : i32, i32
  }
  func.func @transform_3(%arg0: i32, %arg1: i32) -> (i32, i32) {
    %c0_i32 = arith.constant 0 : i32
    %c0_i32_0 = arith.constant 0 : i32
    %c0_i32_1 = arith.constant 0 : i32
    return %c0_i32, %c0_i32_0 : i32, i32
  }
  func.func @transform_4(%arg0: i32, %arg1: i32) -> (i32, i32) {
    %c0_i32 = arith.constant 0 : i32
    %c0_i32_0 = arith.constant 0 : i32
    %c0_i32_1 = arith.constant 0 : i32
    return %c0_i32, %c0_i32_0 : i32, i32
  }
  func.func @transform_5(%arg0: i32, %arg1: i32) -> (i32, i32) {
    %c0_i32 = arith.constant 0 : i32
    %c0_i32_0 = arith.constant 0 : i32
    %c0_i32_1 = arith.constant 0 : i32
    return %c0_i32, %c0_i32_0 : i32, i32
  }
  func.func @transform_6(%arg0: i32, %arg1: i32) -> (i32, i32, i32) {
    %c0_i32 = arith.constant 0 : i32
    %c0_i32_0 = arith.constant 0 : i32
    return %arg0, %arg1, %c0_i32 : i32, i32, i32
  }
}

</mosaic_0001>

<llo_original>
// kernel: tpu_custom_call.1
$region0: #{tpu_custom_call.1}
  #allocation0 [shape = 'u32[]', space=smem, size = 0x4, offset = 0x4, fixed_abs, tag = 'smem constant byte address 0x4 - core index']
  #allocation1 [shape = 'u32[144,128]{1,0:T(1,128)}', space=vmem, size = 0x12000, scoped, tag = 'internal scratch']
  #allocation2 [shape = 'f32[2,8,4]{2,1,0:T(8,128)}', space=vmem, size = 0x2000, scoped, tag = 'scratch operand']
  #allocation3 [shape = 'f32[2,8,4]{2,1,0:T(8,128)}', space=vmem, size = 0x2000, scoped, tag = 'scratch operand']
  %s0 = inlined_call_operand.hbm [shape: f32[2,8,8], index: 0, kind: input, shape index: {}]
  %s1 = inlined_call_operand.hbm [shape: f32[2,8,8], index: 1, kind: input, shape index: {}]
  %s2 = inlined_call_operand.hbm [shape: f32[8,8], index: 2, kind: input, shape index: {}]
  %s3 = inlined_call_operand.vmem [shape: f32[8,8], index: 3, kind: input, shape index: {}]
  %s4 = inlined_call_operand.hbm [shape: f32[8,8], index: 4, kind: input, shape index: {}]
  %s5 = inlined_call_operand.vmem [shape: f32[8,8], index: 5, kind: input, shape index: {}]
  %s6 = inlined_call_operand.hbm [shape: f32[2,8,8], index: 6, kind: output, shape index: {}]
  %s7 = sld [smem:[#allocation0]]
  $region77: #{tpu_custom_call.1} parent=0
    _
  %s9 = ssub.s32 1, %s7
  %s10 = scalar_select 0, %s9, %s7
  $region1: #{tpu_custom_call.1} parent=0
    #allocation4 [shape = 'u8[8192]{0}', space=vmem, size = 0x2000, scoped, tag = 'input window, operand 0']
    #allocation5 [shape = 's32[2]{0}', space=sflag, size = 0x8, scoped, tag = 'scoped memory for tpu_custom_call.1']
    #allocation6 [shape = 's32[2]{0}', space=sflag, size = 0x8, scoped, tag = 'scoped memory for tpu_custom_call.1']
    #allocation7 [shape = 'u8[8192]{0}', space=vmem, size = 0x2000, scoped, tag = 'input window, operand 1']
    #allocation8 [shape = 's32[2]{0}', space=sflag, size = 0x8, scoped, tag = 'scoped memory for tpu_custom_call.1']
    #allocation9 [shape = 'u8[4096]{0}', space=vmem, size = 0x1000, scoped, tag = 'input window, operand 2, single buffered']
    #allocation10 [shape = 'u8[4096]{0}', space=vmem, size = 0x1000, scoped, tag = 'input window, operand 4, single buffered']
    #allocation11 [shape = 's32[1]{0}', space=sflag, size = 0x4, scoped, tag = 'scoped memory for tpu_custom_call.1']
    #allocation12 [shape = 'u8[8192]{0}', space=vmem, size = 0x2000, scoped, tag = 'output window, operand 0']
    %11 = vsyncpa [#allocation5], 0
    %s12 = scalar_lea.sflag [#allocation5], 1
    %13 = vsyncpa %s12, 0
    %14 = vsyncpa [#allocation8], 0
    %s15 = scalar_lea.sflag [#allocation8], 1
    %16 = vsyncpa %s15, 0
    %17 = vsyncpa [#allocation11], 0
    %18 = vsyncpa [#allocation6], 0
    %s19 = scalar_lea.sflag [#allocation6], 1
    %20 = vsyncpa %s19, 0
    loop: start=0, step=1, limit=4
    $region2: #{tpu_custom_call.1} parent=1 // loop_pre_header
      _
    $region3: #{tpu_custom_call.1} parent=1 // loop_header
      %s22 = sphi 0, %s26
      %p23 = scmp.ge.s32.totalorder %s22, 4
      %s29 = sphi 0, %s41
      %s30 = sphi 0, %s37
      %s31 = sphi 0, %s29
      %s32 = sphi 0, %s30
      %s33 = sphi 0, %s31
      %s34 = sphi 0, %s32
      %s46 = sphi 0, %s48
      %s49 = sphi 0, %s46
      %s50 = sphi 0, %s49
      %s66 = sphi 0, %s50
      %s72 = sphi 0, %s74
      %s75 = sphi 0, %s72
      %s76 = sphi 0, %s75
      %s92 = sphi 0, %s76
      %s96 = sphi 0, %s96
      %s98 = sphi 0, %s96
      %s99 = sphi 0, %s98
      %s113 = sphi 0, %s99
      %s117 = sphi 0, %s117
      %s119 = sphi 0, %s117
      %s120 = sphi 0, %s119
      %s134 = sphi 0, %s120
      %s138 = sphi 0, %s138
      %s140 = sphi 0, %s138
      %s141 = sphi 0, %s140
      %s155 = sphi 0, %s141
      %s159 = sphi 0, %s159
      %s161 = sphi 0, %s159
      %s162 = sphi 0, %s161
      %s176 = sphi 0, %s162
      %s184 = sphi 0, %s186
      %s187 = sphi 0, %s184
      %s188 = sphi 0, %s187
      %s204 = sphi 0, %s188
    $region4: #{tpu_custom_call.1} parent=1 // loop_header_branch
      %25 = sbr.rel (%p23) target = $region8
    $region5: #{tpu_custom_call.1} parent=1 // loop_body
      %s27 = ssub.s32 %s22, 1
      %s28 = ssub.s32 %s22, 2
      %s35 = sadd.s32 1, %s30
      %p36 = scmp.ge.s32.totalorder %s35, 1
      %s37 = scalar_select %p36, 0, %s35
      %s38 = sadd.s32 1, %s29
      %s39 = scalar_select %p36, %s38, %s29
      %p40 = scmp.ge.s32.totalorder %s39, 2
      %s41 = scalar_select %p40, 0, %s39
      %s42 = ssub.s32 %s29, %s41
      %s43 = ssub.s32 %s30, %s37
      %s44 = sor.u32 %s42, %s43
      %p45 = scmp.eq.s32.totalorder %s44, 0
      %s47 = sadd.s32 %s46, 1
      %s48 = scalar_select %p45, %s46, %s47
      %p51 = pneg %p45
      %p52 = scmp.eq.s32.totalorder %s22, 1
      %p53 = por %p51, %p52
      %p54 = scmp.ne.s32.totalorder %s46, %s49
      %p55 = scmp.eq.s32.totalorder %s22, 0
      %p56 = por %p54, %p55
      %p57 = scmp.ne.s32.totalorder %s46, %s49
      %p58 = scmp.eq.s32.totalorder %s27, 1
      %p59 = por %p57, %p58
      %p60 = scmp.ne.s32.totalorder %s49, %s50
      %p61 = scmp.eq.s32.totalorder %s27, 0
      %p62 = por %p60, %p61
      %p63 = scmp.ne.s32.totalorder %s49, %s50
      %p64 = scmp.eq.s32.totalorder %s28, 1
      %p65 = por %p63, %p64
      %p67 = scmp.ne.s32.totalorder %s50, %s66
      %p68 = scmp.eq.s32.totalorder %s28, 0
      %p69 = por %p67, %p68
      %s70 = ssub.s32 %s29, %s41
      %p71 = scmp.eq.s32.totalorder %s70, 0
      %s73 = sadd.s32 %s72, 1
      %s74 = scalar_select %p71, %s72, %s73
      %p77 = pneg %p71
      %p78 = scmp.eq.s32.totalorder %s22, 1
      %p79 = por %p77, %p78
      %p80 = scmp.ne.s32.totalorder %s72, %s75
      %p81 = scmp.eq.s32.totalorder %s22, 0
      %p82 = por %p80, %p81
      %p83 = scmp.ne.s32.totalorder %s72, %s75
      %p84 = scmp.eq.s32.totalorder %s27, 1
      %p85 = por %p83, %p84
      %p86 = scmp.ne.s32.totalorder %s75, %s76
      %p87 = scmp.eq.s32.totalorder %s27, 0
      %p88 = por %p86, %p87
      %p89 = scmp.ne.s32.totalorder %s75, %s76
      %p90 = scmp.eq.s32.totalorder %s28, 1
      %p91 = por %p89, %p90
      %p93 = scmp.ne.s32.totalorder %s76, %s92
      %p94 = scmp.eq.s32.totalorder %s28, 0
      %p95 = por %p93, %p94
      %s97 = sadd.s32 %s96, 1
      %p100 = scmp.eq.s32.totalorder %s22, 1
      %p101 = scmp.ne.s32.totalorder %s96, %s98
      %p102 = scmp.eq.s32.totalorder %s22, 0
      %p103 = por %p101, %p102
      %p104 = scmp.ne.s32.totalorder %s96, %s98
      %p105 = scmp.eq.s32.totalorder %s27, 1
      %p106 = por %p104, %p105
      %p107 = scmp.ne.s32.totalorder %s98, %s99
      %p108 = scmp.eq.s32.totalorder %s27, 0
      %p109 = por %p107, %p108
      %p110 = scmp.ne.s32.totalorder %s98, %s99
      %p111 = scmp.eq.s32.totalorder %s28, 1
      %p112 = por %p110, %p111
      %p114 = scmp.ne.s32.totalorder %s99, %s113
      %p115 = scmp.eq.s32.totalorder %s28, 0
      %p116 = por %p114, %p115
      %s118 = sadd.s32 %s117, 1
      %p121 = scmp.eq.s32.totalorder %s22, 1
      %p122 = scmp.ne.s32.totalorder %s117, %s119
      %p123 = scmp.eq.s32.totalorder %s22, 0
      %p124 = por %p122, %p123
      %p125 = scmp.ne.s32.totalorder %s117, %s119
      %p126 = scmp.eq.s32.totalorder %s27, 1
      %p127 = por %p125, %p126
      %p128 = scmp.ne.s32.totalorder %s119, %s120
      %p129 = scmp.eq.s32.totalorder %s27, 0
      %p130 = por %p128, %p129
      %p131 = scmp.ne.s32.totalorder %s119, %s120
      %p132 = scmp.eq.s32.totalorder %s28, 1
      %p133 = por %p131, %p132
      %p135 = scmp.ne.s32.totalorder %s120, %s134
      %p136 = scmp.eq.s32.totalorder %s28, 0
      %p137 = por %p135, %p136
      %s139 = sadd.s32 %s138, 1
      %p142 = scmp.eq.s32.totalorder %s22, 1
      %p143 = scmp.ne.s32.totalorder %s138, %s140
      %p144 = scmp.eq.s32.totalorder %s22, 0
      %p145 = por %p143, %p144
      %p146 = scmp.ne.s32.totalorder %s138, %s140
      %p147 = scmp.eq.s32.totalorder %s27, 1
      %p148 = por %p146, %p147
      %p149 = scmp.ne.s32.totalorder %s140, %s141
      %p150 = scmp.eq.s32.totalorder %s27, 0
      %p151 = por %p149, %p150
      %p152 = scmp.ne.s32.totalorder %s140, %s141
      %p153 = scmp.eq.s32.totalorder %s28, 1
      %p154 = por %p152, %p153
      %p156 = scmp.ne.s32.totalorder %s141, %s155
      %p157 = scmp.eq.s32.totalorder %s28, 0
      %p158 = por %p156, %p157
      %s160 = sadd.s32 %s159, 1
      %p163 = scmp.eq.s32.totalorder %s22, 1
      %p164 = scmp.ne.s32.totalorder %s159, %s161
      %p165 = scmp.eq.s32.totalorder %s22, 0
      %p166 = por %p164, %p165
      %p167 = scmp.ne.s32.totalorder %s159, %s161
      %p168 = scmp.eq.s32.totalorder %s27, 1
      %p169 = por %p167, %p168
      %p170 = scmp.ne.s32.totalorder %s161, %s162
      %p171 = scmp.eq.s32.totalorder %s27, 0
      %p172 = por %p170, %p171
      %p173 = scmp.ne.s32.totalorder %s161, %s162
      %p174 = scmp.eq.s32.totalorder %s28, 1
      %p175 = por %p173, %p174
      %p177 = scmp.ne.s32.totalorder %s162, %s176
      %p178 = scmp.eq.s32.totalorder %s28, 0
      %p179 = por %p177, %p178
      %s180 = ssub.s32 %s29, %s41
      %s181 = ssub.s32 %s30, %s37
      %s182 = sor.u32 %s180, %s181
      %p183 = scmp.eq.s32.totalorder %s182, 0
      %s185 = sadd.s32 %s184, 1
      %s186 = scalar_select %p183, %s184, %s185
      %p189 = pneg %p183
      %p190 = scmp.eq.s32.totalorder %s22, 1
      %p191 = por %p189, %p190
      %p192 = scmp.ne.s32.totalorder %s184, %s187
      %p193 = scmp.eq.s32.totalorder %s22, 0
      %p194 = por %p192, %p193
      %p195 = scmp.ne.s32.totalorder %s184, %s187
      %p196 = scmp.eq.s32.totalorder %s27, 1
      %p197 = por %p195, %p196
      %p198 = scmp.ne.s32.totalorder %s187, %s188
      %p199 = scmp.eq.s32.totalorder %s27, 0
      %p200 = por %p198, %p199
      %p201 = scmp.ne.s32.totalorder %s187, %s188
      %p202 = scmp.eq.s32.totalorder %s28, 1
      %p203 = por %p201, %p202
      %p205 = scmp.ne.s32.totalorder %s188, %s204
      %p206 = scmp.eq.s32.totalorder %s28, 0
      %p207 = por %p205, %p206
      %p208 = scmp.le.s32.totalorder 1, %s22
      %p209 = scmp.lt.s32.totalorder %s22, 3
      %p210 = pnand %p208, %p209
      %p211 = pneg %p210
      // Predicated region
      $region9: #{tpu_custom_call.1} parent=5 // pred_check
        _
      $region10: #{tpu_custom_call.1} parent=5 // pred_check_branch
        %213 = sbr.rel (%p210) target = $region12
      $region11: #{tpu_custom_call.1} parent=5 // pred_region
        %s214 = ssub.s32 %s22, 1
        // Predicated region
        $region13: #{tpu_custom_call.1} parent=11 // pred_check
          %p215 = pneg %p109
        $region14: #{tpu_custom_call.1} parent=11 // pred_check_branch
          %217 = sbr.rel (%p215) target = $region16
        $region15: #{tpu_custom_call.1} parent=11 // pred_region
          %s219 = ssub.s32 128, 128
          %220 = vsyncadd [#allocation8], %s219
          %s222 = sshll.u32 [#allocation9], 4
          %s223 = int_to_ptr.vmem [resolvable:$true] %s222
          %225 = dma.hbm_to_vmem [thread:$0]  %s2, 128, %s223, [#allocation8]
        $region16: #{tpu_custom_call.1} parent=11 // pred_fallthru
          _
        // Predicated region
        $region17: #{tpu_custom_call.1} parent=11 // pred_check
          %p226 = pneg %p130
        $region18: #{tpu_custom_call.1} parent=11 // pred_check_branch
          %228 = sbr.rel (%p226) target = $region20
        $region19: #{tpu_custom_call.1} parent=11 // pred_region
          _
        $region20: #{tpu_custom_call.1} parent=11 // pred_fallthru
          _
        // Predicated region
        $region21: #{tpu_custom_call.1} parent=11 // pred_check
          %p229 = pneg %p151
        $region22: #{tpu_custom_call.1} parent=11 // pred_check_branch
          %231 = sbr.rel (%p229) target = $region24
        $region23: #{tpu_custom_call.1} parent=11 // pred_region
          %s233 = ssub.s32 128, 128
          %234 = vsyncadd [#allocation11], %s233
          %s236 = sshll.u32 [#allocation10], 4
          %s237 = int_to_ptr.vmem [resolvable:$true] %s236
          %239 = dma.hbm_to_vmem [thread:$0]  %s4, 128, %s237, [#allocation11]
        $region24: #{tpu_custom_call.1} parent=11 // pred_fallthru
          _
        // Predicated region
        $region25: #{tpu_custom_call.1} parent=11 // pred_check
          %p240 = pneg %p172
        $region26: #{tpu_custom_call.1} parent=11 // pred_check_branch
          %242 = sbr.rel (%p240) target = $region28
        $region27: #{tpu_custom_call.1} parent=11 // pred_region
          _
        $region28: #{tpu_custom_call.1} parent=11 // pred_fallthru
          _
      $region12: #{tpu_custom_call.1} parent=5 // pred_fallthru
        _
      %p243 = scmp.lt.s32.totalorder %s22, 2
      // Predicated region
      $region29: #{tpu_custom_call.1} parent=5 // pred_check
        %p244 = pneg %p243
      $region30: #{tpu_custom_call.1} parent=5 // pred_check_branch
        %246 = sbr.rel (%p244) target = $region32
      $region31: #{tpu_custom_call.1} parent=5 // pred_region
        // Predicated region
        $region33: #{tpu_custom_call.1} parent=31 // pred_check
          %p247 = pneg %p56
        $region34: #{tpu_custom_call.1} parent=31 // pred_check_branch
          %249 = sbr.rel (%p247) target = $region36
        $region35: #{tpu_custom_call.1} parent=31 // pred_region
          %s250 = sand.u32 %s46, 1
          %s251 = scalar_lea.sflag [#allocation5], %s250
          %s252 = sand.u32 %s46, 1
          %s253 = smul.addr %s252, 8
          %s254 = scalar_lea.vmem [#allocation4], %s253
          %s256 = ssub.s32 128, 128
          %257 = vsyncadd %s251, %s256
          %s258 = sadd.s32 %s30, %s29
          %s259 = smul.addr %s258, 128
          %s260 = scalar_lea.hbm %s0, %s259
          %s262 = sshll.u32 %s254, 4
          %s263 = int_to_ptr.vmem [resolvable:$true] %s262
          %265 = dma.hbm_to_vmem [thread:$0]  %s260, 128, %s263, %s251
        $region36: #{tpu_custom_call.1} parent=31 // pred_fallthru
          _
        // Predicated region
        $region37: #{tpu_custom_call.1} parent=31 // pred_check
          %p266 = pneg %p82
        $region38: #{tpu_custom_call.1} parent=31 // pred_check_branch
          %268 = sbr.rel (%p266) target = $region40
        $region39: #{tpu_custom_call.1} parent=31 // pred_region
          %s269 = sand.u32 %s22, 1
          %s270 = scalar_lea.sflag [#allocation8], %s269
          %s271 = sand.u32 %s72, 1
          %s272 = smul.addr %s271, 8
          %s273 = scalar_lea.vmem [#allocation7], %s272
          %s275 = ssub.s32 128, 128
          %276 = vsyncadd %s270, %s275
          %s277 = smul.addr %s29, 128
          %s278 = scalar_lea.hbm %s1, %s277
          %s280 = sshll.u32 %s273, 4
          %s281 = int_to_ptr.vmem [resolvable:$true] %s280
          %283 = dma.hbm_to_vmem [thread:$0]  %s278, 128, %s281, %s270
        $region40: #{tpu_custom_call.1} parent=31 // pred_fallthru
          _
      $region32: #{tpu_custom_call.1} parent=5 // pred_fallthru
        _
      %p284 = scmp.le.s32.totalorder 1, %s22
      %p285 = scmp.lt.s32.totalorder %s22, 3
      %p286 = pnand %p284, %p285
      %p287 = pneg %p286
      // Predicated region
      $region41: #{tpu_custom_call.1} parent=5 // pred_check
        _
      $region42: #{tpu_custom_call.1} parent=5 // pred_check_branch
        %289 = sbr.rel (%p286) target = $region44
      $region43: #{tpu_custom_call.1} parent=5 // pred_region
        %s290 = ssub.s32 %s22, 1
        %s291 = sand.u32 %s49, 1
        %s292 = scalar_lea.sflag [#allocation5], %s291
        %s293 = sand.u32 %s49, 1
        %s294 = smul.addr %s293, 8
        %s295 = scalar_lea.vmem [#allocation4], %s294
        // Predicated region
        $region45: #{tpu_custom_call.1} parent=43 // pred_check
          %p296 = pneg %p62
        $region46: #{tpu_custom_call.1} parent=43 // pred_check_branch
          %298 = sbr.rel (%p296) target = $region48
        $region47: #{tpu_custom_call.1} parent=43 // pred_region
          %299 = dma.done %s292, 128
        $region48: #{tpu_custom_call.1} parent=43 // pred_fallthru
          _
        %s300 = sand.u32 %s27, 1
        %s301 = scalar_lea.sflag [#allocation8], %s300
        %s302 = sand.u32 %s75, 1
        %s303 = smul.addr %s302, 8
        %s304 = scalar_lea.vmem [#allocation7], %s303
        // Predicated region
        $region49: #{tpu_custom_call.1} parent=43 // pred_check
          %p305 = pneg %p88
        $region50: #{tpu_custom_call.1} parent=43 // pred_check_branch
          %307 = sbr.rel (%p305) target = $region52
        $region51: #{tpu_custom_call.1} parent=43 // pred_region
          %308 = dma.done %s301, 128
        $region52: #{tpu_custom_call.1} parent=43 // pred_fallthru
          _
        // Predicated region
        $region53: #{tpu_custom_call.1} parent=43 // pred_check
          %p309 = pneg %p109
        $region54: #{tpu_custom_call.1} parent=43 // pred_check_branch
          %311 = sbr.rel (%p309) target = $region56
        $region55: #{tpu_custom_call.1} parent=43 // pred_region
          %312 = dma.done [#allocation8], 128
        $region56: #{tpu_custom_call.1} parent=43 // pred_fallthru
          _
        // Predicated region
        $region57: #{tpu_custom_call.1} parent=43 // pred_check
          %p313 = pneg %p151
        $region58: #{tpu_custom_call.1} parent=43 // pred_check_branch
          %315 = sbr.rel (%p313) target = $region60
        $region59: #{tpu_custom_call.1} parent=43 // pred_region
          %316 = dma.done [#allocation11], 128
        $region60: #{tpu_custom_call.1} parent=43 // pred_fallthru
          _
        %s317 = sand.u32 %s49, 1
        %s318 = scalar_lea.sflag [#allocation5], %s317
        %s319 = sand.u32 %s49, 1
        %s320 = smul.addr %s319, 8
        %s321 = scalar_lea.vmem [#allocation4], %s320
        %p322 = pneg %p62
        %p323 = pneg %p59
        %s324 = sand.u32 %s27, 1
        %s325 = scalar_lea.sflag [#allocation8], %s324
        %s326 = sand.u32 %s75, 1
        %s327 = smul.addr %s326, 8
        %s328 = scalar_lea.vmem [#allocation7], %s327
        %p329 = pneg %p88
        %p330 = pneg %p85
        %p331 = pneg %p109
        %p332 = pneg %p106
        %p333 = pneg %p130
        %p334 = pneg %p127
        %p335 = pneg %p151
        %p336 = pneg %p148
        %p337 = pneg %p172
        %p338 = pneg %p169
        %p339 = pneg %p200
        %p340 = pneg %p197
        %s341 = sand.u32 %s187, 1
        %s342 = scalar_lea.sflag [#allocation6], %s341
        %s343 = sand.u32 %s187, 1
        %s344 = smul.addr %s343, 8
        %s345 = scalar_lea.vmem [#allocation12], %s344
        %p346 = scmp.eq.s32.totalorder %s32, 0
        // Predicated region
        $region61: #{tpu_custom_call.1} parent=43 // pred_check
          %p347 = pneg %p346
        $region62: #{tpu_custom_call.1} parent=43 // pred_check_branch
          %349 = sbr.rel (%p347) target = $region64
        $region63: #{tpu_custom_call.1} parent=43 // pred_region
          %v350 = vld [vmem:[%s304] sm:$0xff]
          %v351 = vld [vmem:[%s3] sm:$0xff]
          %vm352 = vcmask 64512
          %v354 = vsel %vm352, %v350, 0
          %356 = vmatprep.subr.mxu0 0.0
          %357 = vmatpush1.msra.mxu0 %v351
          %358 = vmatprep.subr.mxu0 0.0
          %359 = vmatpush1.msra.mxu0 0.0
          %360 = vmatprep.subr.mxu0 0.0
          %361 = vmatpush1.msra.mxu0 0.0
          %362 = vmatprep.subr.mxu0 0.0
          %363 = vmatpush1.msra.mxu0 0.0
          %364 = vmatprep.subr.mxu0 0.0
          %365 = vmatpush1.msra.mxu0 0.0
          %366 = vmatprep.subr.mxu0 0.0
          %367 = vmatpush1.msra.mxu0 0.0
          %368 = vmatprep.subr.mxu0 0.0
          %369 = vmatpush1.msra.mxu0 0.0
          %370 = vmatprep.subr.mxu0 0.0
          %371 = vmatpush1.msra.mxu0 0.0
          %372 = vmatprep.subr.mxu0 0.0
          %373 = vmatpush1.msra.mxu0 0.0
          %374 = vmatprep.subr.mxu0 0.0
          %375 = vmatpush1.msra.mxu0 0.0
          %376 = vmatprep.subr.mxu0 0.0
          %377 = vmatpush1.msra.mxu0 0.0
          %378 = vmatprep.subr.mxu0 0.0
          %379 = vmatpush1.msra.mxu0 0.0
          %380 = vmatprep.subr.mxu0 0.0
          %381 = vmatpush1.msra.mxu0 0.0
          %382 = vmatprep.subr.mxu0 0.0
          %383 = vmatpush1.msra.mxu0 0.0
          %384 = vmatprep.subr.mxu0 0.0
          %385 = vmatpush1.msra.mxu0 0.0
          %386 = vmatprep.subr.mxu0 0.0
          %387 = vmatpush1.msra.mxu0 0.0
          %388 = vmatprep.subr.mxu0 0.0
          %389 = vmatpush1.msra.mxu0 0.0
          %390 = vmatprep.subr.mxu0 0.0
          %391 = vmatpush1.msra.mxu0 0.0
          %392 = vmatprep.subr.mxu0 0.0
          %393 = vmatpush1.msra.mxu0 0.0
          %394 = vmatprep.subr.mxu0 0.0
          %395 = vmatpush1.msra.mxu0 0.0
          %396 = vmatprep.subr.mxu0 0.0
          %397 = vmatpush1.msra.mxu0 0.0
          %398 = vmatprep.subr.mxu0 0.0
          %399 = vmatpush1.msra.mxu0 0.0
          %400 = vmatprep.subr.mxu0 0.0
          %401 = vmatpush1.msra.mxu0 0.0
          %402 = vmatprep.subr.mxu0 0.0
          %403 = vmatpush1.msra.mxu0 0.0
          %404 = vmatprep.subr.mxu0 0.0
          %405 = vmatpush1.msra.mxu0 0.0
          %406 = vmatprep.subr.mxu0 0.0
          %407 = vmatpush1.msra.mxu0 0.0
          %408 = vmatprep.subr.mxu0 0.0
          %409 = vmatpush1.msra.mxu0 0.0
          %410 = vmatprep.subr.mxu0 0.0
          %411 = vmatpush1.msra.mxu0 0.0
          %412 = vmatprep.subr.mxu0 0.0
          %413 = vmatpush1.msra.mxu0 0.0
          %414 = vmatprep.subr.mxu0 0.0
          %415 = vmatpush1.msra.mxu0 0.0
          %416 = vmatprep.subr.mxu0 0.0
          %417 = vmatpush1.msra.mxu0 0.0
          %418 = vmatprep.subr.mxu0 0.0
          %419 = vmatpush1.msra.mxu0 0.0
          %420 = vmatprep.mubr.f32.mxu0 0.0
          %421 = vmatmul.mubr.f32.gmra.mrb[0].mxu0 %v354
          %v422 = vpop.f32.mrb[0].mxu0
          %v423 = vadd.f32 0.0, %v422
          %v424 = vpop.f32.mrb[0].mxu0
          %425 = vdwg.mxu0
          %v426 = vld [vmem:[#allocation10] sm:$0xff]
          %427 = vmatprep.subr.mxu0 0.0
          %428 = vmatpush1.msra.mxu0 %v426
          %429 = vmatprep.subr.mxu0 0.0
          %430 = vmatpush1.msra.mxu0 0.0
          %431 = vmatprep.subr.mxu0 0.0
          %432 = vmatpush1.msra.mxu0 0.0
          %433 = vmatprep.subr.mxu0 0.0
          %434 = vmatpush1.msra.mxu0 0.0
          %435 = vmatprep.subr.mxu0 0.0
          %436 = vmatpush1.msra.mxu0 0.0
          %437 = vmatprep.subr.mxu0 0.0
          %438 = vmatpush1.msra.mxu0 0.0
          %439 = vmatprep.subr.mxu0 0.0
          %440 = vmatpush1.msra.mxu0 0.0
          %441 = vmatprep.subr.mxu0 0.0
          %442 = vmatpush1.msra.mxu0 0.0
          %443 = vmatprep.subr.mxu0 0.0
          %444 = vmatpush1.msra.mxu0 0.0
          %445 = vmatprep.subr.mxu0 0.0
          %446 = vmatpush1.msra.mxu0 0.0
          %447 = vmatprep.subr.mxu0 0.0
          %448 = vmatpush1.msra.mxu0 0.0
          %449 = vmatprep.subr.mxu0 0.0
          %450 = vmatpush1.msra.mxu0 0.0
          %451 = vmatprep.subr.mxu0 0.0
          %452 = vmatpush1.msra.mxu0 0.0
          %453 = vmatprep.subr.mxu0 0.0
          %454 = vmatpush1.msra.mxu0 0.0
          %455 = vmatprep.subr.mxu0 0.0
          %456 = vmatpush1.msra.mxu0 0.0
          %457 = vmatprep.subr.mxu0 0.0
          %458 = vmatpush1.msra.mxu0 0.0
          %459 = vmatprep.subr.mxu0 0.0
          %460 = vmatpush1.msra.mxu0 0.0
          %461 = vmatprep.subr.mxu0 0.0
          %462 = vmatpush1.msra.mxu0 0.0
          %463 = vmatprep.subr.mxu0 0.0
          %464 = vmatpush1.msra.mxu0 0.0
          %465 = vmatprep.subr.mxu0 0.0
          %466 = vmatpush1.msra.mxu0 0.0
          %467 = vmatprep.subr.mxu0 0.0
          %468 = vmatpush1.msra.mxu0 0.0
          %469 = vmatprep.subr.mxu0 0.0
          %470 = vmatpush1.msra.mxu0 0.0
          %471 = vmatprep.subr.mxu0 0.0
          %472 = vmatpush1.msra.mxu0 0.0
          %473 = vmatprep.subr.mxu0 0.0
          %474 = vmatpush1.msra.mxu0 0.0
          %475 = vmatprep.subr.mxu0 0.0
          %476 = vmatpush1.msra.mxu0 0.0
          %477 = vmatprep.subr.mxu0 0.0
          %478 = vmatpush1.msra.mxu0 0.0
          %479 = vmatprep.subr.mxu0 0.0
          %480 = vmatpush1.msra.mxu0 0.0
          %481 = vmatprep.subr.mxu0 0.0
          %482 = vmatpush1.msra.mxu0 0.0
          %483 = vmatprep.subr.mxu0 0.0
          %484 = vmatpush1.msra.mxu0 0.0
          %485 = vmatprep.subr.mxu0 0.0
          %486 = vmatpush1.msra.mxu0 0.0
          %487 = vmatprep.subr.mxu0 0.0
          %488 = vmatpush1.msra.mxu0 0.0
          %489 = vmatprep.subr.mxu0 0.0
          %490 = vmatpush1.msra.mxu0 0.0
          %491 = vmatprep.mubr.f32.mxu0 0.0
          %492 = vmatmul.mubr.f32.gmra.mrb[0].mxu0 %v354
          %v493 = vpop.f32.mrb[0].mxu0
          %v494 = vadd.f32 0.0, %v493
          %v495 = vpop.f32.mrb[0].mxu0
          %496 = vdwg.mxu0
          %498 = vrot.lane.b32.xlu0 %v423, 124
          %v499 = vpop.permute.xlu0 %498
          %vm501 = vcmask 31744
          %502 = vst.msk [vmem:[#allocation2] sm:$0xff] %vm501, %v423
          %503 = vst.msk [vmem:[#allocation2 + $0x8] sm:$0xff] %vm501, %v499
          %505 = vrot.lane.b32.xlu0 %v494, 124
          %v506 = vpop.permute.xlu0 %505
          %508 = vst.msk [vmem:[#allocation3] sm:$0xff] %vm501, %v494
          %509 = vst.msk [vmem:[#allocation3 + $0x8] sm:$0xff] %vm501, %v506
        $region64: #{tpu_custom_call.1} parent=43 // pred_fallthru
          _
        %v510 = vld [vmem:[%s295] sm:$0xff]
        %v511 = vld [vmem:[#allocation9] sm:$0xff]
        %vm512 = vcmask 64512
        %v514 = vsel %vm512, %v510, 0
        %516 = vmatprep.subr.mxu0 0.0
        %517 = vmatpush1.msra.mxu0 %v511
        %518 = vmatprep.subr.mxu0 0.0
        %519 = vmatpush1.msra.mxu0 0.0
        %520 = vmatprep.subr.mxu0 0.0
        %521 = vmatpush1.msra.mxu0 0.0
        %522 = vmatprep.subr.mxu0 0.0
        %523 = vmatpush1.msra.mxu0 0.0
        %524 = vmatprep.subr.mxu0 0.0
        %525 = vmatpush1.msra.mxu0 0.0
        %526 = vmatprep.subr.mxu0 0.0
        %527 = vmatpush1.msra.mxu0 0.0
        %528 = vmatprep.subr.mxu0 0.0
        %529 = vmatpush1.msra.mxu0 0.0
        %530 = vmatprep.subr.mxu0 0.0
        %531 = vmatpush1.msra.mxu0 0.0
        %532 = vmatprep.subr.mxu0 0.0
        %533 = vmatpush1.msra.mxu0 0.0
        %534 = vmatprep.subr.mxu0 0.0
        %535 = vmatpush1.msra.mxu0 0.0
        %536 = vmatprep.subr.mxu0 0.0
        %537 = vmatpush1.msra.mxu0 0.0
        %538 = vmatprep.subr.mxu0 0.0
        %539 = vmatpush1.msra.mxu0 0.0
        %540 = vmatprep.subr.mxu0 0.0
        %541 = vmatpush1.msra.mxu0 0.0
        %542 = vmatprep.subr.mxu0 0.0
        %543 = vmatpush1.msra.mxu0 0.0
        %544 = vmatprep.subr.mxu0 0.0
        %545 = vmatpush1.msra.mxu0 0.0
        %546 = vmatprep.subr.mxu0 0.0
        %547 = vmatpush1.msra.mxu0 0.0
        %548 = vmatprep.subr.mxu0 0.0
        %549 = vmatpush1.msra.mxu0 0.0
        %550 = vmatprep.subr.mxu0 0.0
        %551 = vmatpush1.msra.mxu0 0.0
        %552 = vmatprep.subr.mxu0 0.0
        %553 = vmatpush1.msra.mxu0 0.0
        %554 = vmatprep.subr.mxu0 0.0
        %555 = vmatpush1.msra.mxu0 0.0
        %556 = vmatprep.subr.mxu0 0.0
        %557 = vmatpush1.msra.mxu0 0.0
        %558 = vmatprep.subr.mxu0 0.0
        %559 = vmatpush1.msra.mxu0 0.0
        %560 = vmatprep.subr.mxu0 0.0
        %561 = vmatpush1.msra.mxu0 0.0
        %562 = vmatprep.subr.mxu0 0.0
        %563 = vmatpush1.msra.mxu0 0.0
        %564 = vmatprep.subr.mxu0 0.0
        %565 = vmatpush1.msra.mxu0 0.0
        %566 = vmatprep.subr.mxu0 0.0
        %567 = vmatpush1.msra.mxu0 0.0
        %568 = vmatprep.subr.mxu0 0.0
        %569 = vmatpush1.msra.mxu0 0.0
        %570 = vmatprep.subr.mxu0 0.0
        %571 = vmatpush1.msra.mxu0 0.0
        %572 = vmatprep.subr.mxu0 0.0
        %573 = vmatpush1.msra.mxu0 0.0
        %574 = vmatprep.subr.mxu0 0.0
        %575 = vmatpush1.msra.mxu0 0.0
        %576 = vmatprep.subr.mxu0 0.0
        %577 = vmatpush1.msra.mxu0 0.0
        %578 = vmatprep.subr.mxu0 0.0
        %579 = vmatpush1.msra.mxu0 0.0
        %580 = vmatprep.mubr.f32.mxu0 0.0
        %581 = vmatmul.mubr.f32.gmra.mrb[0].mxu0 %v514
        %v582 = vpop.f32.mrb[0].mxu0
        %v583 = vadd.f32 0.0, %v582
        %v584 = vpop.f32.mrb[0].mxu0
        %585 = vdwg.mxu0
        %587 = vrot.lane.b32.xlu0 %v583, 124
        %v588 = vpop.permute.xlu0 %587
        %v589 = vld [vmem:[#allocation2] sm:$0xff]
        %v590 = vld [vmem:[#allocation2 + $0x8] sm:$0xff]
        %vm591 = vcmask 31744
        %v592 = vsel %vm591, %v583, 0
        %v595 = vsel %vm591, %v589, 0
        %597 = vmatprep.subr.mxu0 0.0
        %598 = vmatpush1.xpose.msra.mxu0 %v595
        %599 = vmatprep.subr.mxu0 0.0
        %600 = vmatpush1.xpose.msra.mxu0 0.0
        %601 = vmatprep.subr.mxu0 0.0
        %602 = vmatpush1.xpose.msra.mxu0 0.0
        %603 = vmatprep.subr.mxu0 0.0
        %604 = vmatpush1.xpose.msra.mxu0 0.0
        %605 = vmatprep.subr.mxu0 0.0
        %606 = vmatpush1.xpose.msra.mxu0 0.0
        %607 = vmatprep.subr.mxu0 0.0
        %608 = vmatpush1.xpose.msra.mxu0 0.0
        %609 = vmatprep.subr.mxu0 0.0
        %610 = vmatpush1.xpose.msra.mxu0 0.0
        %611 = vmatprep.subr.mxu0 0.0
        %612 = vmatpush1.xpose.msra.mxu0 0.0
        %613 = vmatprep.subr.mxu0 0.0
        %614 = vmatpush1.xpose.msra.mxu0 0.0
        %615 = vmatprep.subr.mxu0 0.0
        %616 = vmatpush1.xpose.msra.mxu0 0.0
        %617 = vmatprep.subr.mxu0 0.0
        %618 = vmatpush1.xpose.msra.mxu0 0.0
        %619 = vmatprep.subr.mxu0 0.0
        %620 = vmatpush1.xpose.msra.mxu0 0.0
        %621 = vmatprep.subr.mxu0 0.0
        %622 = vmatpush1.xpose.msra.mxu0 0.0
        %623 = vmatprep.subr.mxu0 0.0
        %624 = vmatpush1.xpose.msra.mxu0 0.0
        %625 = vmatprep.subr.mxu0 0.0
        %626 = vmatpush1.xpose.msra.mxu0 0.0
        %627 = vmatprep.subr.mxu0 0.0
        %628 = vmatpush1.xpose.msra.mxu0 0.0
        %629 = vmatprep.subr.mxu0 0.0
        %630 = vmatpush1.xpose.msra.mxu0 0.0
        %631 = vmatprep.subr.mxu0 0.0
        %632 = vmatpush1.xpose.msra.mxu0 0.0
        %633 = vmatprep.subr.mxu0 0.0
        %634 = vmatpush1.xpose.msra.mxu0 0.0
        %635 = vmatprep.subr.mxu0 0.0
        %636 = vmatpush1.xpose.msra.mxu0 0.0
        %637 = vmatprep.subr.mxu0 0.0
        %638 = vmatpush1.xpose.msra.mxu0 0.0
        %639 = vmatprep.subr.mxu0 0.0
        %640 = vmatpush1.xpose.msra.mxu0 0.0
        %641 = vmatprep.subr.mxu0 0.0
        %642 = vmatpush1.xpose.msra.mxu0 0.0
        %643 = vmatprep.subr.mxu0 0.0
        %644 = vmatpush1.xpose.msra.mxu0 0.0
        %645 = vmatprep.subr.mxu0 0.0
        %646 = vmatpush1.xpose.msra.mxu0 0.0
        %647 = vmatprep.subr.mxu0 0.0
        %648 = vmatpush1.xpose.msra.mxu0 0.0
        %649 = vmatprep.subr.mxu0 0.0
        %650 = vmatpush1.xpose.msra.mxu0 0.0
        %651 = vmatprep.subr.mxu0 0.0
        %652 = vmatpush1.xpose.msra.mxu0 0.0
        %653 = vmatprep.subr.mxu0 0.0
        %654 = vmatpush1.xpose.msra.mxu0 0.0
        %655 = vmatprep.subr.mxu0 0.0
        %656 = vmatpush1.xpose.msra.mxu0 0.0
        %657 = vmatprep.subr.mxu0 0.0
        %658 = vmatpush1.xpose.msra.mxu0 0.0
        %659 = vmatprep.subr.mxu0 0.0
        %660 = vmatpush1.xpose.msra.mxu0 0.0
        %661 = vmatprep.mubr.f32.mxu0 0.0
        %662 = vmatmul.mubr.f32.gmra.mrb[0].mxu0 %v592
        %v663 = vpop.f32.mrb[0].mxu0
        %v664 = vadd.f32 0.0, %v663
        %v665 = vpop.f32.mrb[0].mxu0
        %666 = vdwg.mxu0
        %v667 = vsel %vm591, %v588, 0
        %v670 = vsel %vm591, %v590, 0
        %672 = vmatprep.subr.mxu0 0.0
        %673 = vmatpush1.xpose.msra.mxu0 %v670
        %674 = vmatprep.subr.mxu0 0.0
        %675 = vmatpush1.xpose.msra.mxu0 0.0
        %676 = vmatprep.subr.mxu0 0.0
        %677 = vmatpush1.xpose.msra.mxu0 0.0
        %678 = vmatprep.subr.mxu0 0.0
        %679 = vmatpush1.xpose.msra.mxu0 0.0
        %680 = vmatprep.subr.mxu0 0.0
        %681 = vmatpush1.xpose.msra.mxu0 0.0
        %682 = vmatprep.subr.mxu0 0.0
        %683 = vmatpush1.xpose.msra.mxu0 0.0
        %684 = vmatprep.subr.mxu0 0.0
        %685 = vmatpush1.xpose.msra.mxu0 0.0
        %686 = vmatprep.subr.mxu0 0.0
        %687 = vmatpush1.xpose.msra.mxu0 0.0
        %688 = vmatprep.subr.mxu0 0.0
        %689 = vmatpush1.xpose.msra.mxu0 0.0
        %690 = vmatprep.subr.mxu0 0.0
        %691 = vmatpush1.xpose.msra.mxu0 0.0
        %692 = vmatprep.subr.mxu0 0.0
        %693 = vmatpush1.xpose.msra.mxu0 0.0
        %694 = vmatprep.subr.mxu0 0.0
        %695 = vmatpush1.xpose.msra.mxu0 0.0
        %696 = vmatprep.subr.mxu0 0.0
        %697 = vmatpush1.xpose.msra.mxu0 0.0
        %698 = vmatprep.subr.mxu0 0.0
        %699 = vmatpush1.xpose.msra.mxu0 0.0
        %700 = vmatprep.subr.mxu0 0.0
        %701 = vmatpush1.xpose.msra.mxu0 0.0
        %702 = vmatprep.subr.mxu0 0.0
        %703 = vmatpush1.xpose.msra.mxu0 0.0
        %704 = vmatprep.subr.mxu0 0.0
        %705 = vmatpush1.xpose.msra.mxu0 0.0
        %706 = vmatprep.subr.mxu0 0.0
        %707 = vmatpush1.xpose.msra.mxu0 0.0
        %708 = vmatprep.subr.mxu0 0.0
        %709 = vmatpush1.xpose.msra.mxu0 0.0
        %710 = vmatprep.subr.mxu0 0.0
        %711 = vmatpush1.xpose.msra.mxu0 0.0
        %712 = vmatprep.subr.mxu0 0.0
        %713 = vmatpush1.xpose.msra.mxu0 0.0
        %714 = vmatprep.subr.mxu0 0.0
        %715 = vmatpush1.xpose.msra.mxu0 0.0
        %716 = vmatprep.subr.mxu0 0.0
        %717 = vmatpush1.xpose.msra.mxu0 0.0
        %718 = vmatprep.subr.mxu0 0.0
        %719 = vmatpush1.xpose.msra.mxu0 0.0
        %720 = vmatprep.subr.mxu0 0.0
        %721 = vmatpush1.xpose.msra.mxu0 0.0
        %722 = vmatprep.subr.mxu0 0.0
        %723 = vmatpush1.xpose.msra.mxu0 0.0
        %724 = vmatprep.subr.mxu0 0.0
        %725 = vmatpush1.xpose.msra.mxu0 0.0
        %726 = vmatprep.subr.mxu0 0.0
        %727 = vmatpush1.xpose.msra.mxu0 0.0
        %728 = vmatprep.subr.mxu0 0.0
        %729 = vmatpush1.xpose.msra.mxu0 0.0
        %730 = vmatprep.subr.mxu0 0.0
        %731 = vmatpush1.xpose.msra.mxu0 0.0
        %732 = vmatprep.subr.mxu0 0.0
        %733 = vmatpush1.xpose.msra.mxu0 0.0
        %734 = vmatprep.subr.mxu0 0.0
        %735 = vmatpush1.xpose.msra.mxu0 0.0
        %736 = vmatprep.mubr.f32.mxu0 0.0
        %737 = vmatmul.mubr.f32.gmra.mrb[0].mxu0 %v667
        %v738 = vpop.f32.mrb[0].mxu0
        %v739 = vadd.f32 0.0, %v738
        %v740 = vpop.f32.mrb[0].mxu0
        %741 = vdwg.mxu0
        %v742 = vsel %vm512, %v664, -inf
        %743 = vmax.xlane.f32.xlu0 %v742
        %v744 = vpop.xlane.xlu0 %743
        %v745 = vsel %vm512, %v739, -inf
        %746 = vmax.xlane.f32.xlu0 %v745
        %v747 = vpop.xlane.xlu0 %746
        %v748 = vsub.f32 %v664, %v744
        %v749 = vsub.f32 %v739, %v747
        %v750 = vmul.f32 %v748, 1.442695
        %v751 = vpow.pop %v750
        %v752 = vmul.f32 %v749, 1.442695
        %v753 = vpow.pop %v752
        %v754 = vsel %vm512, %v751, 0.0
        %755 = vadd.xlane.f32.xlu0 %v754
        %v756 = vpop.xlane.xlu0 %755
        %v757 = vsel %vm512, %v753, 0.0
        %758 = vadd.xlane.f32.xlu0 %v757
        %v759 = vpop.xlane.xlu0 %758
        %v760 = vld [vmem:[#allocation3] sm:$0xff]
        %v761 = vld [vmem:[#allocation3 + $0x8] sm:$0xff]
        %v763 = vsel %vm512, %v751, 0
        %765 = vmatprep.subr.mxu0 0.0
        %766 = vmatpush1.msra.mxu0 %v760
        %767 = vmatprep.subr.mxu0 0.0
        %768 = vmatpush1.msra.mxu0 0.0
        %769 = vmatprep.subr.mxu0 0.0
        %770 = vmatpush1.msra.mxu0 0.0
        %771 = vmatprep.subr.mxu0 0.0
        %772 = vmatpush1.msra.mxu0 0.0
        %773 = vmatprep.subr.mxu0 0.0
        %774 = vmatpush1.msra.mxu0 0.0
        %775 = vmatprep.subr.mxu0 0.0
        %776 = vmatpush1.msra.mxu0 0.0
        %777 = vmatprep.subr.mxu0 0.0
        %778 = vmatpush1.msra.mxu0 0.0
        %779 = vmatprep.subr.mxu0 0.0
        %780 = vmatpush1.msra.mxu0 0.0
        %781 = vmatprep.subr.mxu0 0.0
        %782 = vmatpush1.msra.mxu0 0.0
        %783 = vmatprep.subr.mxu0 0.0
        %784 = vmatpush1.msra.mxu0 0.0
        %785 = vmatprep.subr.mxu0 0.0
        %786 = vmatpush1.msra.mxu0 0.0
        %787 = vmatprep.subr.mxu0 0.0
        %788 = vmatpush1.msra.mxu0 0.0
        %789 = vmatprep.subr.mxu0 0.0
        %790 = vmatpush1.msra.mxu0 0.0
        %791 = vmatprep.subr.mxu0 0.0
        %792 = vmatpush1.msra.mxu0 0.0
        %793 = vmatprep.subr.mxu0 0.0
        %794 = vmatpush1.msra.mxu0 0.0
        %795 = vmatprep.subr.mxu0 0.0
        %796 = vmatpush1.msra.mxu0 0.0
        %797 = vmatprep.subr.mxu0 0.0
        %798 = vmatpush1.msra.mxu0 0.0
        %799 = vmatprep.subr.mxu0 0.0
        %800 = vmatpush1.msra.mxu0 0.0
        %801 = vmatprep.subr.mxu0 0.0
        %802 = vmatpush1.msra.mxu0 0.0
        %803 = vmatprep.subr.mxu0 0.0
        %804 = vmatpush1.msra.mxu0 0.0
        %805 = vmatprep.subr.mxu0 0.0
        %806 = vmatpush1.msra.mxu0 0.0
        %807 = vmatprep.subr.mxu0 0.0
        %808 = vmatpush1.msra.mxu0 0.0
        %809 = vmatprep.subr.mxu0 0.0
        %810 = vmatpush1.msra.mxu0 0.0
        %811 = vmatprep.subr.mxu0 0.0
        %812 = vmatpush1.msra.mxu0 0.0
        %813 = vmatprep.subr.mxu0 0.0
        %814 = vmatpush1.msra.mxu0 0.0
        %815 = vmatprep.subr.mxu0 0.0
        %816 = vmatpush1.msra.mxu0 0.0
        %817 = vmatprep.subr.mxu0 0.0
        %818 = vmatpush1.msra.mxu0 0.0
        %819 = vmatprep.subr.mxu0 0.0
        %820 = vmatpush1.msra.mxu0 0.0
        %821 = vmatprep.subr.mxu0 0.0
        %822 = vmatpush1.msra.mxu0 0.0
        %823 = vmatprep.subr.mxu0 0.0
        %824 = vmatpush1.msra.mxu0 0.0
        %825 = vmatprep.subr.mxu0 0.0
        %826 = vmatpush1.msra.mxu0 0.0
        %827 = vmatprep.subr.mxu0 0.0
        %828 = vmatpush1.msra.mxu0 0.0
        %829 = vmatprep.mubr.f32.mxu0 0.0
        %830 = vmatmul.mubr.f32.gmra.mrb[0].mxu0 %v763
        %v831 = vpop.f32.mrb[0].mxu0
        %v832 = vadd.f32 0.0, %v831
        %v833 = vpop.f32.mrb[0].mxu0
        %834 = vdwg.mxu0
        %v836 = vsel %vm512, %v753, 0
        %838 = vmatprep.subr.mxu0 0.0
        %839 = vmatpush1.msra.mxu0 %v761
        %840 = vmatprep.subr.mxu0 0.0
        %841 = vmatpush1.msra.mxu0 0.0
        %842 = vmatprep.subr.mxu0 0.0
        %843 = vmatpush1.msra.mxu0 0.0
        %844 = vmatprep.subr.mxu0 0.0
        %845 = vmatpush1.msra.mxu0 0.0
        %846 = vmatprep.subr.mxu0 0.0
        %847 = vmatpush1.msra.mxu0 0.0
        %848 = vmatprep.subr.mxu0 0.0
        %849 = vmatpush1.msra.mxu0 0.0
        %850 = vmatprep.subr.mxu0 0.0
        %851 = vmatpush1.msra.mxu0 0.0
        %852 = vmatprep.subr.mxu0 0.0
        %853 = vmatpush1.msra.mxu0 0.0
        %854 = vmatprep.subr.mxu0 0.0
        %855 = vmatpush1.msra.mxu0 0.0
        %856 = vmatprep.subr.mxu0 0.0
        %857 = vmatpush1.msra.mxu0 0.0
        %858 = vmatprep.subr.mxu0 0.0
        %859 = vmatpush1.msra.mxu0 0.0
        %860 = vmatprep.subr.mxu0 0.0
        %861 = vmatpush1.msra.mxu0 0.0
        %862 = vmatprep.subr.mxu0 0.0
        %863 = vmatpush1.msra.mxu0 0.0
        %864 = vmatprep.subr.mxu0 0.0
        %865 = vmatpush1.msra.mxu0 0.0
        %866 = vmatprep.subr.mxu0 0.0
        %867 = vmatpush1.msra.mxu0 0.0
        %868 = vmatprep.subr.mxu0 0.0
        %869 = vmatpush1.msra.mxu0 0.0
        %870 = vmatprep.subr.mxu0 0.0
        %871 = vmatpush1.msra.mxu0 0.0
        %872 = vmatprep.subr.mxu0 0.0
        %873 = vmatpush1.msra.mxu0 0.0
        %874 = vmatprep.subr.mxu0 0.0
        %875 = vmatpush1.msra.mxu0 0.0
        %876 = vmatprep.subr.mxu0 0.0
        %877 = vmatpush1.msra.mxu0 0.0
        %878 = vmatprep.subr.mxu0 0.0
        %879 = vmatpush1.msra.mxu0 0.0
        %880 = vmatprep.subr.mxu0 0.0
        %881 = vmatpush1.msra.mxu0 0.0
        %882 = vmatprep.subr.mxu0 0.0
        %883 = vmatpush1.msra.mxu0 0.0
        %884 = vmatprep.subr.mxu0 0.0
        %885 = vmatpush1.msra.mxu0 0.0
        %886 = vmatprep.subr.mxu0 0.0
        %887 = vmatpush1.msra.mxu0 0.0
        %888 = vmatprep.subr.mxu0 0.0
        %889 = vmatpush1.msra.mxu0 0.0
        %890 = vmatprep.subr.mxu0 0.0
        %891 = vmatpush1.msra.mxu0 0.0
        %892 = vmatprep.subr.mxu0 0.0
        %893 = vmatpush1.msra.mxu0 0.0
        %894 = vmatprep.subr.mxu0 0.0
        %895 = vmatpush1.msra.mxu0 0.0
        %896 = vmatprep.subr.mxu0 0.0
        %897 = vmatpush1.msra.mxu0 0.0
        %898 = vmatprep.subr.mxu0 0.0
        %899 = vmatpush1.msra.mxu0 0.0
        %900 = vmatprep.subr.mxu0 0.0
        %901 = vmatpush1.msra.mxu0 0.0
        %902 = vmatprep.mubr.f32.mxu0 0.0
        %903 = vmatmul.mubr.f32.gmra.mrb[0].mxu0 %v836
        %v904 = vpop.f32.mrb[0].mxu0
        %v905 = vadd.f32 0.0, %v904
        %v906 = vpop.f32.mrb[0].mxu0
        %907 = vdwg.mxu0
        %v908 = vrcp.pop %v756
        %v909 = vrcp.pop %v759
        %v910 = vmul.f32 %v832, %v908
        %v911 = vmul.f32 %v905, %v909
        %913 = vrot.lane.b32.xlu0 %v911, 4
        %v914 = vpop.permute.xlu0 %913
        %v916 = vsel %vm591, %v910, %v914
        %v917 = vld [vmem:[%s5] sm:$0xff]
        %v919 = vsel %vm512, %v916, 0
        %921 = vmatprep.subr.mxu0 0.0
        %922 = vmatpush1.msra.mxu0 %v917
        %923 = vmatprep.subr.mxu0 0.0
        %924 = vmatpush1.msra.mxu0 0.0
        %925 = vmatprep.subr.mxu0 0.0
        %926 = vmatpush1.msra.mxu0 0.0
        %927 = vmatprep.subr.mxu0 0.0
        %928 = vmatpush1.msra.mxu0 0.0
        %929 = vmatprep.subr.mxu0 0.0
        %930 = vmatpush1.msra.mxu0 0.0
        %931 = vmatprep.subr.mxu0 0.0
        %932 = vmatpush1.msra.mxu0 0.0
        %933 = vmatprep.subr.mxu0 0.0
        %934 = vmatpush1.msra.mxu0 0.0
        %935 = vmatprep.subr.mxu0 0.0
        %936 = vmatpush1.msra.mxu0 0.0
        %937 = vmatprep.subr.mxu0 0.0
        %938 = vmatpush1.msra.mxu0 0.0
        %939 = vmatprep.subr.mxu0 0.0
        %940 = vmatpush1.msra.mxu0 0.0
        %941 = vmatprep.subr.mxu0 0.0
        %942 = vmatpush1.msra.mxu0 0.0
        %943 = vmatprep.subr.mxu0 0.0
        %944 = vmatpush1.msra.mxu0 0.0
        %945 = vmatprep.subr.mxu0 0.0
        %946 = vmatpush1.msra.mxu0 0.0
        %947 = vmatprep.subr.mxu0 0.0
        %948 = vmatpush1.msra.mxu0 0.0
        %949 = vmatprep.subr.mxu0 0.0
        %950 = vmatpush1.msra.mxu0 0.0
        %951 = vmatprep.subr.mxu0 0.0
        %952 = vmatpush1.msra.mxu0 0.0
        %953 = vmatprep.subr.mxu0 0.0
        %954 = vmatpush1.msra.mxu0 0.0
        %955 = vmatprep.subr.mxu0 0.0
        %956 = vmatpush1.msra.mxu0 0.0
        %957 = vmatprep.subr.mxu0 0.0
        %958 = vmatpush1.msra.mxu0 0.0
        %959 = vmatprep.subr.mxu0 0.0
        %960 = vmatpush1.msra.mxu0 0.0
        %961 = vmatprep.subr.mxu0 0.0
        %962 = vmatpush1.msra.mxu0 0.0
        %963 = vmatprep.subr.mxu0 0.0
        %964 = vmatpush1.msra.mxu0 0.0
        %965 = vmatprep.subr.mxu0 0.0
        %966 = vmatpush1.msra.mxu0 0.0
        %967 = vmatprep.subr.mxu0 0.0
        %968 = vmatpush1.msra.mxu0 0.0
        %969 = vmatprep.subr.mxu0 0.0
        %970 = vmatpush1.msra.mxu0 0.0
        %971 = vmatprep.subr.mxu0 0.0
        %972 = vmatpush1.msra.mxu0 0.0
        %973 = vmatprep.subr.mxu0 0.0
        %974 = vmatpush1.msra.mxu0 0.0
        %975 = vmatprep.subr.mxu0 0.0
        %976 = vmatpush1.msra.mxu0 0.0
        %977 = vmatprep.subr.mxu0 0.0
        %978 = vmatpush1.msra.mxu0 0.0
        %979 = vmatprep.subr.mxu0 0.0
        %980 = vmatpush1.msra.mxu0 0.0
        %981 = vmatprep.subr.mxu0 0.0
        %982 = vmatpush1.msra.mxu0 0.0
        %983 = vmatprep.subr.mxu0 0.0
        %984 = vmatpush1.msra.mxu0 0.0
        %985 = vmatprep.mubr.f32.mxu0 0.0
        %986 = vmatmul.mubr.f32.gmra.mrb[0].mxu0 %v919
        %v987 = vpop.f32.mrb[0].mxu0
        %v988 = vadd.f32 0.0, %v987
        %v989 = vpop.f32.mrb[0].mxu0
        %990 = vdwg.mxu0
        %v991 = vadd.f32 %v510, %v988
        %992 = vst.msk [vmem:[%s345] sm:$0xff] %vm512, %v991
        %s993 = sand.u32 %s187, 1
        %s994 = scalar_lea.sflag [#allocation6], %s993
        %s995 = sand.u32 %s187, 1
        %s996 = smul.addr %s995, 8
        %s997 = scalar_lea.vmem [#allocation12], %s996
        // Predicated region
        $region65: #{tpu_custom_call.1} parent=43 // pred_check
          %p998 = pneg %p197
        $region66: #{tpu_custom_call.1} parent=43 // pred_check_branch
          %1000 = sbr.rel (%p998) target = $region68
        $region67: #{tpu_custom_call.1} parent=43 // pred_region
          %s1002 = ssub.s32 128, 128
          %1003 = vsyncadd %s994, %s1002
          %s1004 = sadd.s32 %s32, %s31
          %s1005 = smul.addr %s1004, 128
          %s1006 = scalar_lea.hbm %s6, %s1005
          %s1008 = sshll.u32 %s997, 4
          %s1009 = int_to_ptr.vmem [resolvable:$true] %s1008
          %1011 = dma.vmem_to_hbm [thread:$0]  %s1009, 128, %s1006, %s994
        $region68: #{tpu_custom_call.1} parent=43 // pred_fallthru
          _
      $region44: #{tpu_custom_call.1} parent=5 // pred_fallthru
        _
      %p1012 = scmp.le.s32.totalorder 2, %s22
      // Predicated region
      $region69: #{tpu_custom_call.1} parent=5 // pred_check
        %p1013 = pneg %p1012
      $region70: #{tpu_custom_call.1} parent=5 // pred_check_branch
        %1015 = sbr.rel (%p1013) target = $region72
      $region71: #{tpu_custom_call.1} parent=5 // pred_region
        %s1016 = ssub.s32 %s22, 2
        // Predicated region
        $region73: #{tpu_custom_call.1} parent=71 // pred_check
          %p1017 = pneg %p203
        $region74: #{tpu_custom_call.1} parent=71 // pred_check_branch
          %1019 = sbr.rel (%p1017) target = $region76
        $region75: #{tpu_custom_call.1} parent=71 // pred_region
          %s1020 = sand.u32 %s188, 1
          %s1021 = scalar_lea.sflag [#allocation6], %s1020
          %s1022 = sand.u32 %s188, 1
          %s1023 = smul.addr %s1022, 8
          %s1024 = scalar_lea.vmem [#allocation12], %s1023
          %1025 = dma.done %s1021, 128
        $region76: #{tpu_custom_call.1} parent=71 // pred_fallthru
          _
      $region72: #{tpu_custom_call.1} parent=5 // pred_fallthru
        _
    $region6: #{tpu_custom_call.1} parent=1 // loop_footer
      %s26 = sadd.s32 1, %s22
    $region7: #{tpu_custom_call.1} parent=1 // loop_footer_branch
      %21 = sbr.rel target = $region3
    $region8: #{tpu_custom_call.1} parent=1 // loop_exit
      _
    %1026 = vsyncpa [#allocation5], 1
    %s1027 = scalar_lea.sflag [#allocation5], 1
    %1028 = vsyncpa %s1027, 1
    %1029 = vsyncpa [#allocation8], 1
    %s1030 = scalar_lea.sflag [#allocation8], 1
    %1031 = vsyncpa %s1030, 1
    %1032 = vsyncpa [#allocation11], 1
    %1033 = vsyncpa [#allocation6], 1
    %s1034 = scalar_lea.sflag [#allocation6], 1
    %1035 = vsyncpa %s1034, 1

// kernel: tpu_custom_call.1
$region0: #{tpu_custom_call.1}
  #allocation0 [shape = 'u32[]', space=smem, size = 0x4, offset = 0x4, fixed_abs, tag = 'smem constant byte address 0x4 - core index']
  #allocation1 [shape = 'u32[144,128]{1,0:T(1,128)}', space=vmem, size = 0x12000, scoped, tag = 'internal scratch']
  #allocation2 [shape = 'f32[2,8,4]{2,1,0:T(8,128)}', space=vmem, size = 0x2000, scoped, tag = 'scratch operand']
  #allocation3 [shape = 'f32[2,8,4]{2,1,0:T(8,128)}', space=vmem, size = 0x2000, scoped, tag = 'scratch operand']
  %s0 = inlined_call_operand.hbm [shape: f32[2,8,8], index: 0, kind: input, shape index: {}]
  %s1 = inlined_call_operand.hbm [shape: f32[2,8,8], index: 1, kind: input, shape index: {}]
  %s2 = inlined_call_operand.hbm [shape: f32[8,8], index: 2, kind: input, shape index: {}]
  %s3 = inlined_call_operand.vmem [shape: f32[8,8], index: 3, kind: input, shape index: {}]
  %s4 = inlined_call_operand.hbm [shape: f32[8,8], index: 4, kind: input, shape index: {}]
  %s5 = inlined_call_operand.vmem [shape: f32[8,8], index: 5, kind: input, shape index: {}]
  %s6 = inlined_call_operand.hbm [shape: f32[2,8,8], index: 6, kind: output, shape index: {}]
  %s7 = sld [smem:[#allocation0]]
  $region77: #{tpu_custom_call.1} parent=0
    _
  %s9 = ssub.s32 1, %s7
  %s10 = scalar_select 0, %s9, %s7
  $region1: #{tpu_custom_call.1} parent=0
    #allocation4 [shape = 'u8[8192]{0}', space=vmem, size = 0x2000, scoped, tag = 'input window, operand 0']
    #allocation5 [shape = 's32[2]{0}', space=sflag, size = 0x8, scoped, tag = 'scoped memory for tpu_custom_call.1']
    #allocation6 [shape = 's32[2]{0}', space=sflag, size = 0x8, scoped, tag = 'scoped memory for tpu_custom_call.1']
    #allocation7 [shape = 'u8[8192]{0}', space=vmem, size = 0x2000, scoped, tag = 'input window, operand 1']
    #allocation8 [shape = 's32[2]{0}', space=sflag, size = 0x8, scoped, tag = 'scoped memory for tpu_custom_call.1']
    #allocation9 [shape = 'u8[4096]{0}', space=vmem, size = 0x1000, scoped, tag = 'input window, operand 2, single buffered']
    #allocation10 [shape = 'u8[4096]{0}', space=vmem, size = 0x1000, scoped, tag = 'input window, operand 4, single buffered']
    #allocation11 [shape = 's32[1]{0}', space=sflag, size = 0x4, scoped, tag = 'scoped memory for tpu_custom_call.1']
    #allocation12 [shape = 'u8[8192]{0}', space=vmem, size = 0x2000, scoped, tag = 'output window, operand 0']
    %11 = vsyncpa [#allocation5], 0
    %s12 = scalar_lea.sflag [#allocation5], 1
    %13 = vsyncpa %s12, 0
    %14 = vsyncpa [#allocation8], 0
    %s15 = scalar_lea.sflag [#allocation8], 1
    %16 = vsyncpa %s15, 0
    %17 = vsyncpa [#allocation11], 0
    %18 = vsyncpa [#allocation6], 0
    %s19 = scalar_lea.sflag [#allocation6], 1
    %20 = vsyncpa %s19, 0
    loop: start=0, step=1, limit=4
    $region2: #{tpu_custom_call.1} parent=1 // loop_pre_header
      _
    $region3: #{tpu_custom_call.1} parent=1 // loop_header
      %s22 = sphi 0, %s26
      %p23 = scmp.ge.s32.totalorder %s22, 4
      %s29 = sphi 0, %s41
      %s30 = sphi 0, %s37
      %s31 = sphi 0, %s29
      %s32 = sphi 0, %s30
      %s33 = sphi 0, %s31
      %s34 = sphi 0, %s32
      %s46 = sphi 0, %s48
      %s49 = sphi 0, %s46
      %s50 = sphi 0, %s49
      %s66 = sphi 0, %s50
      %s72 = sphi 0, %s74
      %s75 = sphi 0, %s72
      %s76 = sphi 0, %s75
      %s92 = sphi 0, %s76
      %s96 = sphi 0, %s96
      %s98 = sphi 0, %s96
      %s99 = sphi 0, %s98
      %s113 = sphi 0, %s99
      %s117 = sphi 0, %s117
      %s119 = sphi 0, %s117
      %s120 = sphi 0, %s119
      %s134 = sphi 0, %s120
      %s138 = sphi 0, %s138
      %s140 = sphi 0, %s138
      %s141 = sphi 0, %s140
      %s155 = sphi 0, %s141
      %s159 = sphi 0, %s159
      %s161 = sphi 0, %s159
      %s162 = sphi 0, %s161
      %s176 = sphi 0, %s162
      %s184 = sphi 0, %s186
      %s187 = sphi 0, %s184
      %s188 = sphi 0, %s187
      %s204 = sphi 0, %s188
    $region4: #{tpu_custom_call.1} parent=1 // loop_header_branch
      %25 = sbr.rel (%p23) target = $region8
    $region5: #{tpu_custom_call.1} parent=1 // loop_body
      %s27 = ssub.s32 %s22, 1
      %s28 = ssub.s32 %s22, 2
      %s35 = sadd.s32 1, %s30
      %p36 = scmp.ge.s32.totalorder %s35, 1
      %s37 = scalar_select %p36, 0, %s35
      %s38 = sadd.s32 1, %s29
      %s39 = scalar_select %p36, %s38, %s29
      %p40 = scmp.ge.s32.totalorder %s39, 2
      %s41 = scalar_select %p40, 0, %s39
      %s42 = ssub.s32 %s29, %s41
      %s43 = ssub.s32 %s30, %s37
      %s44 = sor.u32 %s42, %s43
      %p45 = scmp.eq.s32.totalorder %s44, 0
      %s47 = sadd.s32 %s46, 1
      %s48 = scalar_select %p45, %s46, %s47
      %p51 = pneg %p45
      %p52 = scmp.eq.s32.totalorder %s22, 1
      %p53 = por %p51, %p52
      %p54 = scmp.ne.s32.totalorder %s46, %s49
      %p55 = scmp.eq.s32.totalorder %s22, 0
      %p56 = por %p54, %p55
      %p57 = scmp.ne.s32.totalorder %s46, %s49
      %p58 = scmp.eq.s32.totalorder %s27, 1
      %p59 = por %p57, %p58
      %p60 = scmp.ne.s32.totalorder %s49, %s50
      %p61 = scmp.eq.s32.totalorder %s27, 0
      %p62 = por %p60, %p61
      %p63 = scmp.ne.s32.totalorder %s49, %s50
      %p64 = scmp.eq.s32.totalorder %s28, 1
      %p65 = por %p63, %p64
      %p67 = scmp.ne.s32.totalorder %s50, %s66
      %p68 = scmp.eq.s32.totalorder %s28, 0
      %p69 = por %p67, %p68
      %s70 = ssub.s32 %s29, %s41
      %p71 = scmp.eq.s32.totalorder %s70, 0
      %s73 = sadd.s32 %s72, 1
      %s74 = scalar_select %p71, %s72, %s73
      %p77 = pneg %p71
      %p78 = scmp.eq.s32.totalorder %s22, 1
      %p79 = por %p77, %p78
      %p80 = scmp.ne.s32.totalorder %s72, %s75
      %p81 = scmp.eq.s32.totalorder %s22, 0
      %p82 = por %p80, %p81
      %p83 = scmp.ne.s32.totalorder %s72, %s75
      %p84 = scmp.eq.s32.totalorder %s27, 1
      %p85 = por %p83, %p84
      %p86 = scmp.ne.s32.totalorder %s75, %s76
      %p87 = scmp.eq.s32.totalorder %s27, 0
      %p88 = por %p86, %p87
      %p89 = scmp.ne.s32.totalorder %s75, %s76
      %p90 = scmp.eq.s32.totalorder %s28, 1
      %p91 = por %p89, %p90
      %p93 = scmp.ne.s32.totalorder %s76, %s92
      %p94 = scmp.eq.s32.totalorder %s28, 0
      %p95 = por %p93, %p94
      %s97 = sadd.s32 %s96, 1
      %p100 = scmp.eq.s32.totalorder %s22, 1
      %p101 = scmp.ne.s32.totalorder %s96, %s98
      %p102 = scmp.eq.s32.totalorder %s22, 0
      %p103 = por %p101, %p102
      %p104 = scmp.ne.s32.totalorder %s96, %s98
      %p105 = scmp.eq.s32.totalorder %s27, 1
      %p106 = por %p104, %p105
      %p107 = scmp.ne.s32.totalorder %s98, %s99
      %p108 = scmp.eq.s32.totalorder %s27, 0
      %p109 = por %p107, %p108
      %p110 = scmp.ne.s32.totalorder %s98, %s99
      %p111 = scmp.eq.s32.totalorder %s28, 1
      %p112 = por %p110, %p111
      %p114 = scmp.ne.s32.totalorder %s99, %s113
      %p115 = scmp.eq.s32.totalorder %s28, 0
      %p116 = por %p114, %p115
      %s118 = sadd.s32 %s117, 1
      %p121 = scmp.eq.s32.totalorder %s22, 1
      %p122 = scmp.ne.s32.totalorder %s117, %s119
      %p123 = scmp.eq.s32.totalorder %s22, 0
      %p124 = por %p122, %p123
      %p125 = scmp.ne.s32.totalorder %s117, %s119
      %p126 = scmp.eq.s32.totalorder %s27, 1
      %p127 = por %p125, %p126
      %p128 = scmp.ne.s32.totalorder %s119, %s120
      %p129 = scmp.eq.s32.totalorder %s27, 0
      %p130 = por %p128, %p129
      %p131 = scmp.ne.s32.totalorder %s119, %s120
      %p132 = scmp.eq.s32.totalorder %s28, 1
      %p133 = por %p131, %p132
      %p135 = scmp.ne.s32.totalorder %s120, %s134
      %p136 = scmp.eq.s32.totalorder %s28, 0
      %p137 = por %p135, %p136
      %s139 = sadd.s32 %s138, 1
      %p142 = scmp.eq.s32.totalorder %s22, 1
      %p143 = scmp.ne.s32.totalorder %s138, %s140
      %p144 = scmp.eq.s32.totalorder %s22, 0
      %p145 = por %p143, %p144
      %p146 = scmp.ne.s32.totalorder %s138, %s140
      %p147 = scmp.eq.s32.totalorder %s27, 1
      %p148 = por %p146, %p147
      %p149 = scmp.ne.s32.totalorder %s140, %s141
      %p150 = scmp.eq.s32.totalorder %s27, 0
      %p151 = por %p149, %p150
      %p152 = scmp.ne.s32.totalorder %s140, %s141
      %p153 = scmp.eq.s32.totalorder %s28, 1
      %p154 = por %p152, %p153
      %p156 = scmp.ne.s32.totalorder %s141, %s155
      %p157 = scmp.eq.s32.totalorder %s28, 0
      %p158 = por %p156, %p157
      %s160 = sadd.s32 %s159, 1
      %p163 = scmp.eq.s32.totalorder %s22, 1
      %p164 = scmp.ne.s32.totalorder %s159, %s161
      %p165 = scmp.eq.s32.totalorder %s22, 0
      %p166 = por %p164, %p165
      %p167 = scmp.ne.s32.totalorder %s159, %s161
      %p168 = scmp.eq.s32.totalorder %s27, 1
      %p169 = por %p167, %p168
      %p170 = scmp.ne.s32.totalorder %s161, %s162
      %p171 = scmp.eq.s32.totalorder %s27, 0
      %p172 = por %p170, %p171
      %p173 = scmp.ne.s32.totalorder %s161, %s162
      %p174 = scmp.eq.s32.totalorder %s28, 1
      %p175 = por %p173, %p174
      %p177 = scmp.ne.s32.totalorder %s162, %s176
      %p178 = scmp.eq.s32.totalorder %s28, 0
      %p179 = por %p177, %p178
      %s180 = ssub.s32 %s29, %s41
      %s181 = ssub.s32 %s30, %s37
      %s182 = sor.u32 %s180, %s181
      %p183 = scmp.eq.s32.totalorder %s182, 0
      %s185 = sadd.s32 %s184, 1
      %s186 = scalar_select %p183, %s184, %s185
      %p189 = pneg %p183
      %p190 = scmp.eq.s32.totalorder %s22, 1
      %p191 = por %p189, %p190
      %p192 = scmp.ne.s32.totalorder %s184, %s187
      %p193 = scmp.eq.s32.totalorder %s22, 0
      %p194 = por %p192, %p193
      %p195 = scmp.ne.s32.totalorder %s184, %s187
      %p196 = scmp.eq.s32.totalorder %s27, 1
      %p197 = por %p195, %p196
      %p198 = scmp.ne.s32.totalorder %s187, %s188
      %p199 = scmp.eq.s32.totalorder %s27, 0
      %p200 = por %p198, %p199
      %p201 = scmp.ne.s32.totalorder %s187, %s188
      %p202 = scmp.eq.s32.totalorder %s28, 1
      %p203 = por %p201, %p202
      %p205 = scmp.ne.s32.totalorder %s188, %s204
      %p206 = scmp.eq.s32.totalorder %s28, 0
      %p207 = por %p205, %p206
      %p208 = scmp.le.s32.totalorder 1, %s22
      %p209 = scmp.lt.s32.totalorder %s22, 3
      %p210 = pnand %p208, %p209
      %p211 = pneg %p210
      // Predicated region
      $region9: #{tpu_custom_call.1} parent=5 // pred_check
        _
      $region10: #{tpu_custom_call.1} parent=5 // pred_check_branch
        %213 = sbr.rel (%p210) target = $region12
      $region11: #{tpu_custom_call.1} parent=5 // pred_region
        %s214 = ssub.s32 %s22, 1
        // Predicated region
        $region13: #{tpu_custom_call.1} parent=11 // pred_check
          %p215 = pneg %p109
        $region14: #{tpu_custom_call.1} parent=11 // pred_check_branch
          %217 = sbr.rel (%p215) target = $region16
        $region15: #{tpu_custom_call.1} parent=11 // pred_region
          %s219 = ssub.s32 128, 128
          %220 = vsyncadd [#allocation8], %s219
          %s222 = sshll.u32 [#allocation9], 4
          %s223 = int_to_ptr.vmem [resolvable:$true] %s222
          %225 = dma.hbm_to_vmem [thread:$0]  %s2, 128, %s223, [#allocation8]
        $region16: #{tpu_custom_call.1} parent=11 // pred_fallthru
          _
        // Predicated region
        $region17: #{tpu_custom_call.1} parent=11 // pred_check
          %p226 = pneg %p130
        $region18: #{tpu_custom_call.1} parent=11 // pred_check_branch
          %228 = sbr.rel (%p226) target = $region20
        $region19: #{tpu_custom_call.1} parent=11 // pred_region
          _
        $region20: #{tpu_custom_call.1} parent=11 // pred_fallthru
          _
        // Predicated region
        $region21: #{tpu_custom_call.1} parent=11 // pred_check
          %p229 = pneg %p151
        $region22: #{tpu_custom_call.1} parent=11 // pred_check_branch
          %231 = sbr.rel (%p229) target = $region24
        $region23: #{tpu_custom_call.1} parent=11 // pred_region
          %s233 = ssub.s32 128, 128
          %234 = vsyncadd [#allocation11], %s233
          %s236 = sshll.u32 [#allocation10], 4
          %s237 = int_to_ptr.vmem [resolvable:$true] %s236
          %239 = dma.hbm_to_vmem [thread:$0]  %s4, 128, %s237, [#allocation11]
        $region24: #{tpu_custom_call.1} parent=11 // pred_fallthru
          _
        // Predicated region
        $region25: #{tpu_custom_call.1} parent=11 // pred_check
          %p240 = pneg %p172
        $region26: #{tpu_custom_call.1} parent=11 // pred_check_branch
          %242 = sbr.rel (%p240) target = $region28
        $region27: #{tpu_custom_call.1} parent=11 // pred_region
          _
        $region28: #{tpu_custom_call.1} parent=11 // pred_fallthru
          _
      $region12: #{tpu_custom_call.1} parent=5 // pred_fallthru
        _
      %p243 = scmp.lt.s32.totalorder %s22, 2
      // Predicated region
      $region29: #{tpu_custom_call.1} parent=5 // pred_check
        %p244 = pneg %p243
      $region30: #{tpu_custom_call.1} parent=5 // pred_check_branch
        %246 = sbr.rel (%p244) target = $region32
      $region31: #{tpu_custom_call.1} parent=5 // pred_region
        // Predicated region
        $region33: #{tpu_custom_call.1} parent=31 // pred_check
          %p247 = pneg %p56
        $region34: #{tpu_custom_call.1} parent=31 // pred_check_branch
          %249 = sbr.rel (%p247) target = $region36
        $region35: #{tpu_custom_call.1} parent=31 // pred_region
          %s250 = sand.u32 %s46, 1
          %s251 = scalar_lea.sflag [#allocation5], %s250
          %s252 = sand.u32 %s46, 1
          %s253 = smul.addr %s252, 8
          %s254 = scalar_lea.vmem [#allocation4], %s253
          %s256 = ssub.s32 128, 128
          %257 = vsyncadd %s251, %s256
          %s258 = sadd.s32 %s30, %s29
          %s259 = smul.addr %s258, 128
          %s260 = scalar_lea.hbm %s0, %s259
          %s262 = sshll.u32 %s254, 4
          %s263 = int_to_ptr.vmem [resolvable:$true] %s262
          %265 = dma.hbm_to_vmem [thread:$0]  %s260, 128, %s263, %s251
        $region36: #{tpu_custom_call.1} parent=31 // pred_fallthru
          _
        // Predicated region
        $region37: #{tpu_custom_call.1} parent=31 // pred_check
          %p266 = pneg %p82
        $region38: #{tpu_custom_call.1} parent=31 // pred_check_branch
          %268 = sbr.rel (%p266) target = $region40
        $region39: #{tpu_custom_call.1} parent=31 // pred_region
          %s269 = sand.u32 %s22, 1
          %s270 = scalar_lea.sflag [#allocation8], %s269
          %s271 = sand.u32 %s72, 1
          %s272 = smul.addr %s271, 8
          %s273 = scalar_lea.vmem [#allocation7], %s272
          %s275 = ssub.s32 128, 128
          %276 = vsyncadd %s270, %s275
          %s277 = smul.addr %s29, 128
          %s278 = scalar_lea.hbm %s1, %s277
          %s280 = sshll.u32 %s273, 4
          %s281 = int_to_ptr.vmem [resolvable:$true] %s280
          %283 = dma.hbm_to_vmem [thread:$0]  %s278, 128, %s281, %s270
        $region40: #{tpu_custom_call.1} parent=31 // pred_fallthru
          _
      $region32: #{tpu_custom_call.1} parent=5 // pred_fallthru
        _
      %p284 = scmp.le.s32.totalorder 1, %s22
      %p285 = scmp.lt.s32.totalorder %s22, 3
      %p286 = pnand %p284, %p285
      %p287 = pneg %p286
      // Predicated region
      $region41: #{tpu_custom_call.1} parent=5 // pred_check
        _
      $region42: #{tpu_custom_call.1} parent=5 // pred_check_branch
        %289 = sbr.rel (%p286) target = $region44
      $region43: #{tpu_custom_call.1} parent=5 // pred_region
        %s290 = ssub.s32 %s22, 1
        %s291 = sand.u32 %s49, 1
        %s292 = scalar_lea.sflag [#allocation5], %s291
        %s293 = sand.u32 %s49, 1
        %s294 = smul.addr %s293, 8
        %s295 = scalar_lea.vmem [#allocation4], %s294
        // Predicated region
        $region45: #{tpu_custom_call.1} parent=43 // pred_check
          %p296 = pneg %p62
        $region46: #{tpu_custom_call.1} parent=43 // pred_check_branch
          %298 = sbr.rel (%p296) target = $region48
        $region47: #{tpu_custom_call.1} parent=43 // pred_region
          %299 = dma.done %s292, 128
        $region48: #{tpu_custom_call.1} parent=43 // pred_fallthru
          _
        %s300 = sand.u32 %s27, 1
        %s301 = scalar_lea.sflag [#allocation8], %s300
        %s302 = sand.u32 %s75, 1
        %s303 = smul.addr %s302, 8
        %s304 = scalar_lea.vmem [#allocation7], %s303
        // Predicated region
        $region49: #{tpu_custom_call.1} parent=43 // pred_check
          %p305 = pneg %p88
        $region50: #{tpu_custom_call.1} parent=43 // pred_check_branch
          %307 = sbr.rel (%p305) target = $region52
        $region51: #{tpu_custom_call.1} parent=43 // pred_region
          %308 = dma.done %s301, 128
        $region52: #{tpu_custom_call.1} parent=43 // pred_fallthru
          _
        // Predicated region
        $region53: #{tpu_custom_call.1} parent=43 // pred_check
          %p309 = pneg %p109
        $region54: #{tpu_custom_call.1} parent=43 // pred_check_branch
          %311 = sbr.rel (%p309) target = $region56
        $region55: #{tpu_custom_call.1} parent=43 // pred_region
          %312 = dma.done [#allocation8], 128
        $region56: #{tpu_custom_call.1} parent=43 // pred_fallthru
          _
        // Predicated region
        $region57: #{tpu_custom_call.1} parent=43 // pred_check
          %p313 = pneg %p151
        $region58: #{tpu_custom_call.1} parent=43 // pred_check_branch
          %315 = sbr.rel (%p313) target = $region60
        $region59: #{tpu_custom_call.1} parent=43 // pred_region
          %316 = dma.done [#allocation11], 128
        $region60: #{tpu_custom_call.1} parent=43 // pred_fallthru
          _
        %s317 = sand.u32 %s49, 1
        %s318 = scalar_lea.sflag [#allocation5], %s317
        %s319 = sand.u32 %s49, 1
        %s320 = smul.addr %s319, 8
        %s321 = scalar_lea.vmem [#allocation4], %s320
        %p322 = pneg %p62
        %p323 = pneg %p59
        %s324 = sand.u32 %s27, 1
        %s325 = scalar_lea.sflag [#allocation8], %s324
        %s326 = sand.u32 %s75, 1
        %s327 = smul.addr %s326, 8
        %s328 = scalar_lea.vmem [#allocation7], %s327
        %p329 = pneg %p88
        %p330 = pneg %p85
        %p331 = pneg %p109
        %p332 = pneg %p106
        %p333 = pneg %p130
        %p334 = pneg %p127
        %p335 = pneg %p151
        %p336 = pneg %p148
        %p337 = pneg %p172
        %p338 = pneg %p169
        %p339 = pneg %p200
        %p340 = pneg %p197
        %s341 = sand.u32 %s187, 1
        %s342 = scalar_lea.sflag [#allocation6], %s341
        %s343 = sand.u32 %s187, 1
        %s344 = smul.addr %s343, 8
        %s345 = scalar_lea.vmem [#allocation12], %s344
        %p346 = scmp.eq.s32.totalorder %s32, 0
        // Predicated region
        $region61: #{tpu_custom_call.1} parent=43 // pred_check
          %p347 = pneg %p346
        $region62: #{tpu_custom_call.1} parent=43 // pred_check_branch
          %349 = sbr.rel (%p347) target = $region64
        $region63: #{tpu_custom_call.1} parent=43 // pred_region
          %v350 = vld [vmem:[%s304] sm:$0xff]
          %v351 = vld [vmem:[%s3] sm:$0xff]
          %vm352 = vcmask 64512
          %v354 = vsel %vm352, %v350, 0
          %356 = vmatprep.subr.mxu0 0.0
          %357 = vmatpush1.msra.mxu0 %v351
          %358 = vmatprep.subr.mxu0 0.0
          %359 = vmatpush1.msra.mxu0 0.0
          %360 = vmatprep.subr.mxu0 0.0
          %361 = vmatpush1.msra.mxu0 0.0
          %362 = vmatprep.subr.mxu0 0.0
          %363 = vmatpush1.msra.mxu0 0.0
          %364 = vmatprep.subr.mxu0 0.0
          %365 = vmatpush1.msra.mxu0 0.0
          %366 = vmatprep.subr.mxu0 0.0
          %367 = vmatpush1.msra.mxu0 0.0
          %368 = vmatprep.subr.mxu0 0.0
          %369 = vmatpush1.msra.mxu0 0.0
          %370 = vmatprep.subr.mxu0 0.0
          %371 = vmatpush1.msra.mxu0 0.0
          %372 = vmatprep.subr.mxu0 0.0
          %373 = vmatpush1.msra.mxu0 0.0
          %374 = vmatprep.subr.mxu0 0.0
          %375 = vmatpush1.msra.mxu0 0.0
          %376 = vmatprep.subr.mxu0 0.0
          %377 = vmatpush1.msra.mxu0 0.0
          %378 = vmatprep.subr.mxu0 0.0
          %379 = vmatpush1.msra.mxu0 0.0
          %380 = vmatprep.subr.mxu0 0.0
          %381 = vmatpush1.msra.mxu0 0.0
          %382 = vmatprep.subr.mxu0 0.0
          %383 = vmatpush1.msra.mxu0 0.0
          %384 = vmatprep.subr.mxu0 0.0
          %385 = vmatpush1.msra.mxu0 0.0
          %386 = vmatprep.subr.mxu0 0.0
          %387 = vmatpush1.msra.mxu0 0.0
          %388 = vmatprep.subr.mxu0 0.0
          %389 = vmatpush1.msra.mxu0 0.0
          %390 = vmatprep.subr.mxu0 0.0
          %391 = vmatpush1.msra.mxu0 0.0
          %392 = vmatprep.subr.mxu0 0.0
          %393 = vmatpush1.msra.mxu0 0.0
          %394 = vmatprep.subr.mxu0 0.0
          %395 = vmatpush1.msra.mxu0 0.0
          %396 = vmatprep.subr.mxu0 0.0
          %397 = vmatpush1.msra.mxu0 0.0
          %398 = vmatprep.subr.mxu0 0.0
          %399 = vmatpush1.msra.mxu0 0.0
          %400 = vmatprep.subr.mxu0 0.0
          %401 = vmatpush1.msra.mxu0 0.0
          %402 = vmatprep.subr.mxu0 0.0
          %403 = vmatpush1.msra.mxu0 0.0
          %404 = vmatprep.subr.mxu0 0.0
          %405 = vmatpush1.msra.mxu0 0.0
          %406 = vmatprep.subr.mxu0 0.0
          %407 = vmatpush1.msra.mxu0 0.0
          %408 = vmatprep.subr.mxu0 0.0
          %409 = vmatpush1.msra.mxu0 0.0
          %410 = vmatprep.subr.mxu0 0.0
          %411 = vmatpush1.msra.mxu0 0.0
          %412 = vmatprep.subr.mxu0 0.0
          %413 = vmatpush1.msra.mxu0 0.0
          %414 = vmatprep.subr.mxu0 0.0
          %415 = vmatpush1.msra.mxu0 0.0
          %416 = vmatprep.subr.mxu0 0.0
          %417 = vmatpush1.msra.mxu0 0.0
          %418 = vmatprep.subr.mxu0 0.0
          %419 = vmatpush1.msra.mxu0 0.0
          %420 = vmatprep.mubr.f32.mxu0 0.0
          %421 = vmatmul.mubr.f32.gmra.mrb[0].mxu0 %v354
          %v422 = vpop.f32.mrb[0].mxu0
          %v423 = vadd.f32 0.0, %v422
          %v424 = vpop.f32.mrb[0].mxu0
          %425 = vdwg.mxu0
          %v426 = vld [vmem:[#allocation10] sm:$0xff]
          %427 = vmatprep.subr.mxu0 0.0
          %428 = vmatpush1.msra.mxu0 %v426
          %429 = vmatprep.subr.mxu0 0.0
          %430 = vmatpush1.msra.mxu0 0.0
          %431 = vmatprep.subr.mxu0 0.0
          %432 = vmatpush1.msra.mxu0 0.0
          %433 = vmatprep.subr.mxu0 0.0
          %434 = vmatpush1.msra.mxu0 0.0
          %435 = vmatprep.subr.mxu0 0.0
          %436 = vmatpush1.msra.mxu0 0.0
          %437 = vmatprep.subr.mxu0 0.0
          %438 = vmatpush1.msra.mxu0 0.0
          %439 = vmatprep.subr.mxu0 0.0
          %440 = vmatpush1.msra.mxu0 0.0
          %441 = vmatprep.subr.mxu0 0.0
          %442 = vmatpush1.msra.mxu0 0.0
          %443 = vmatprep.subr.mxu0 0.0
          %444 = vmatpush1.msra.mxu0 0.0
          %445 = vmatprep.subr.mxu0 0.0
          %446 = vmatpush1.msra.mxu0 0.0
          %447 = vmatprep.subr.mxu0 0.0
          %448 = vmatpush1.msra.mxu0 0.0
          %449 = vmatprep.subr.mxu0 0.0
          %450 = vmatpush1.msra.mxu0 0.0
          %451 = vmatprep.subr.mxu0 0.0
          %452 = vmatpush1.msra.mxu0 0.0
          %453 = vmatprep.subr.mxu0 0.0
          %454 = vmatpush1.msra.mxu0 0.0
          %455 = vmatprep.subr.mxu0 0.0
          %456 = vmatpush1.msra.mxu0 0.0
          %457 = vmatprep.subr.mxu0 0.0
          %458 = vmatpush1.msra.mxu0 0.0
          %459 = vmatprep.subr.mxu0 0.0
          %460 = vmatpush1.msra.mxu0 0.0
          %461 = vmatprep.subr.mxu0 0.0
          %462 = vmatpush1.msra.mxu0 0.0
          %463 = vmatprep.subr.mxu0 0.0
          %464 = vmatpush1.msra.mxu0 0.0
          %465 = vmatprep.subr.mxu0 0.0
          %466 = vmatpush1.msra.mxu0 0.0
          %467 = vmatprep.subr.mxu0 0.0
          %468 = vmatpush1.msra.mxu0 0.0
          %469 = vmatprep.subr.mxu0 0.0
          %470 = vmatpush1.msra.mxu0 0.0
          %471 = vmatprep.subr.mxu0 0.0
          %472 = vmatpush1.msra.mxu0 0.0
          %473 = vmatprep.subr.mxu0 0.0
          %474 = vmatpush1.msra.mxu0 0.0
          %475 = vmatprep.subr.mxu0 0.0
          %476 = vmatpush1.msra.mxu0 0.0
          %477 = vmatprep.subr.mxu0 0.0
          %478 = vmatpush1.msra.mxu0 0.0
          %479 = vmatprep.subr.mxu0 0.0
          %480 = vmatpush1.msra.mxu0 0.0
          %481 = vmatprep.subr.mxu0 0.0
          %482 = vmatpush1.msra.mxu0 0.0
          %483 = vmatprep.subr.mxu0 0.0
          %484 = vmatpush1.msra.mxu0 0.0
          %485 = vmatprep.subr.mxu0 0.0
          %486 = vmatpush1.msra.mxu0 0.0
          %487 = vmatprep.subr.mxu0 0.0
          %488 = vmatpush1.msra.mxu0 0.0
          %489 = vmatprep.subr.mxu0 0.0
          %490 = vmatpush1.msra.mxu0 0.0
          %491 = vmatprep.mubr.f32.mxu0 0.0
          %492 = vmatmul.mubr.f32.gmra.mrb[0].mxu0 %v354
          %v493 = vpop.f32.mrb[0].mxu0
          %v494 = vadd.f32 0.0, %v493
          %v495 = vpop.f32.mrb[0].mxu0
          %496 = vdwg.mxu0
          %498 = vrot.lane.b32.xlu0 %v423, 124
          %v499 = vpop.permute.xlu0 %498
          %vm501 = vcmask 31744
          %502 = vst.msk [vmem:[#allocation2] sm:$0xff] %vm501, %v423
          %503 = vst.msk [vmem:[#allocation2 + $0x8] sm:$0xff] %vm501, %v499
          %505 = vrot.lane.b32.xlu0 %v494, 124
          %v506 = vpop.permute.xlu0 %505
          %508 = vst.msk [vmem:[#allocation3] sm:$0xff] %vm501, %v494
          %509 = vst.msk [vmem:[#allocation3 + $0x8] sm:$0xff] %vm501, %v506
        $region64: #{tpu_custom_call.1} parent=43 // pred_fallthru
          _
        %v510 = vld [vmem:[%s295] sm:$0xff]
        %v511 = vld [vmem:[#allocation9] sm:$0xff]
        %vm512 = vcmask 64512
        %v514 = vsel %vm512, %v510, 0
        %516 = vmatprep.subr.mxu0 0.0
        %517 = vmatpush1.msra.mxu0 %v511
        %518 = vmatprep.subr.mxu0 0.0
        %519 = vmatpush1.msra.mxu0 0.0
        %520 = vmatprep.subr.mxu0 0.0
        %521 = vmatpush1.msra.mxu0 0.0
        %522 = vmatprep.subr.mxu0 0.0
        %523 = vmatpush1.msra.mxu0 0.0
        %524 = vmatprep.subr.mxu0 0.0
        %525 = vmatpush1.msra.mxu0 0.0
        %526 = vmatprep.subr.mxu0 0.0
        %527 = vmatpush1.msra.mxu0 0.0
        %528 = vmatprep.subr.mxu0 0.0
        %529 = vmatpush1.msra.mxu0 0.0
        %530 = vmatprep.subr.mxu0 0.0
        %531 = vmatpush1.msra.mxu0 0.0
        %532 = vmatprep.subr.mxu0 0.0
        %533 = vmatpush1.msra.mxu0 0.0
        %534 = vmatprep.subr.mxu0 0.0
        %535 = vmatpush1.msra.mxu0 0.0
        %536 = vmatprep.subr.mxu0 0.0
        %537 = vmatpush1.msra.mxu0 0.0
        %538 = vmatprep.subr.mxu0 0.0
        %539 = vmatpush1.msra.mxu0 0.0
        %540 = vmatprep.subr.mxu0 0.0
        %541 = vmatpush1.msra.mxu0 0.0
        %542 = vmatprep.subr.mxu0 0.0
        %543 = vmatpush1.msra.mxu0 0.0
        %544 = vmatprep.subr.mxu0 0.0
        %545 = vmatpush1.msra.mxu0 0.0
        %546 = vmatprep.subr.mxu0 0.0
        %547 = vmatpush1.msra.mxu0 0.0
        %548 = vmatprep.subr.mxu0 0.0
        %549 = vmatpush1.msra.mxu0 0.0
        %550 = vmatprep.subr.mxu0 0.0
        %551 = vmatpush1.msra.mxu0 0.0
        %552 = vmatprep.subr.mxu0 0.0
        %553 = vmatpush1.msra.mxu0 0.0
        %554 = vmatprep.subr.mxu0 0.0
        %555 = vmatpush1.msra.mxu0 0.0
        %556 = vmatprep.subr.mxu0 0.0
        %557 = vmatpush1.msra.mxu0 0.0
        %558 = vmatprep.subr.mxu0 0.0
        %559 = vmatpush1.msra.mxu0 0.0
        %560 = vmatprep.subr.mxu0 0.0
        %561 = vmatpush1.msra.mxu0 0.0
        %562 = vmatprep.subr.mxu0 0.0
        %563 = vmatpush1.msra.mxu0 0.0
        %564 = vmatprep.subr.mxu0 0.0
        %565 = vmatpush1.msra.mxu0 0.0
        %566 = vmatprep.subr.mxu0 0.0
        %567 = vmatpush1.msra.mxu0 0.0
        %568 = vmatprep.subr.mxu0 0.0
        %569 = vmatpush1.msra.mxu0 0.0
        %570 = vmatprep.subr.mxu0 0.0
        %571 = vmatpush1.msra.mxu0 0.0
        %572 = vmatprep.subr.mxu0 0.0
        %573 = vmatpush1.msra.mxu0 0.0
        %574 = vmatprep.subr.mxu0 0.0
        %575 = vmatpush1.msra.mxu0 0.0
        %576 = vmatprep.subr.mxu0 0.0
        %577 = vmatpush1.msra.mxu0 0.0
        %578 = vmatprep.subr.mxu0 0.0
        %579 = vmatpush1.msra.mxu0 0.0
        %580 = vmatprep.mubr.f32.mxu0 0.0
        %581 = vmatmul.mubr.f32.gmra.mrb[0].mxu0 %v514
        %v582 = vpop.f32.mrb[0].mxu0
        %v583 = vadd.f32 0.0, %v582
        %v584 = vpop.f32.mrb[0].mxu0
        %585 = vdwg.mxu0
        %587 = vrot.lane.b32.xlu0 %v583, 124
        %v588 = vpop.permute.xlu0 %587
        %v589 = vld [vmem:[#allocation2] sm:$0xff]
        %v590 = vld [vmem:[#allocation2 + $0x8] sm:$0xff]
        %vm591 = vcmask 31744
        %v592 = vsel %vm591, %v583, 0
        %v595 = vsel %vm591, %v589, 0
        %597 = vmatprep.subr.mxu0 0.0
        %598 = vmatpush1.xpose.msra.mxu0 %v595
        %599 = vmatprep.subr.mxu0 0.0
        %600 = vmatpush1.xpose.msra.mxu0 0.0
        %601 = vmatprep.subr.mxu0 0.0
        %602 = vmatpush1.xpose.msra.mxu0 0.0
        %603 = vmatprep.subr.mxu0 0.0
        %604 = vmatpush1.xpose.msra.mxu0 0.0
        %605 = vmatprep.subr.mxu0 0.0
        %606 = vmatpush1.xpose.msra.mxu0 0.0
        %607 = vmatprep.subr.mxu0 0.0
        %608 = vmatpush1.xpose.msra.mxu0 0.0
        %609 = vmatprep.subr.mxu0 0.0
        %610 = vmatpush1.xpose.msra.mxu0 0.0
        %611 = vmatprep.subr.mxu0 0.0
        %612 = vmatpush1.xpose.msra.mxu0 0.0
        %613 = vmatprep.subr.mxu0 0.0
        %614 = vmatpush1.xpose.msra.mxu0 0.0
        %615 = vmatprep.subr.mxu0 0.0
        %616 = vmatpush1.xpose.msra.mxu0 0.0
        %617 = vmatprep.subr.mxu0 0.0
        %618 = vmatpush1.xpose.msra.mxu0 0.0
        %619 = vmatprep.subr.mxu0 0.0
        %620 = vmatpush1.xpose.msra.mxu0 0.0
        %621 = vmatprep.subr.mxu0 0.0
        %622 = vmatpush1.xpose.msra.mxu0 0.0
        %623 = vmatprep.subr.mxu0 0.0
        %624 = vmatpush1.xpose.msra.mxu0 0.0
        %625 = vmatprep.subr.mxu0 0.0
        %626 = vmatpush1.xpose.msra.mxu0 0.0
        %627 = vmatprep.subr.mxu0 0.0
        %628 = vmatpush1.xpose.msra.mxu0 0.0
        %629 = vmatprep.subr.mxu0 0.0
        %630 = vmatpush1.xpose.msra.mxu0 0.0
        %631 = vmatprep.subr.mxu0 0.0
        %632 = vmatpush1.xpose.msra.mxu0 0.0
        %633 = vmatprep.subr.mxu0 0.0
        %634 = vmatpush1.xpose.msra.mxu0 0.0
        %635 = vmatprep.subr.mxu0 0.0
        %636 = vmatpush1.xpose.msra.mxu0 0.0
        %637 = vmatprep.subr.mxu0 0.0
        %638 = vmatpush1.xpose.msra.mxu0 0.0
        %639 = vmatprep.subr.mxu0 0.0
        %640 = vmatpush1.xpose.msra.mxu0 0.0
        %641 = vmatprep.subr.mxu0 0.0
        %642 = vmatpush1.xpose.msra.mxu0 0.0
        %643 = vmatprep.subr.mxu0 0.0
        %644 = vmatpush1.xpose.msra.mxu0 0.0
        %645 = vmatprep.subr.mxu0 0.0
        %646 = vmatpush1.xpose.msra.mxu0 0.0
        %647 = vmatprep.subr.mxu0 0.0
        %648 = vmatpush1.xpose.msra.mxu0 0.0
        %649 = vmatprep.subr.mxu0 0.0
        %650 = vmatpush1.xpose.msra.mxu0 0.0
        %651 = vmatprep.subr.mxu0 0.0
        %652 = vmatpush1.xpose.msra.mxu0 0.0
        %653 = vmatprep.subr.mxu0 0.0
        %654 = vmatpush1.xpose.msra.mxu0 0.0
        %655 = vmatprep.subr.mxu0 0.0
        %656 = vmatpush1.xpose.msra.mxu0 0.0
        %657 = vmatprep.subr.mxu0 0.0
        %658 = vmatpush1.xpose.msra.mxu0 0.0
        %659 = vmatprep.subr.mxu0 0.0
        %660 = vmatpush1.xpose.msra.mxu0 0.0
        %661 = vmatprep.mubr.f32.mxu0 0.0
        %662 = vmatmul.mubr.f32.gmra.mrb[0].mxu0 %v592
        %v663 = vpop.f32.mrb[0].mxu0
        %v664 = vadd.f32 0.0, %v663
        %v665 = vpop.f32.mrb[0].mxu0
        %666 = vdwg.mxu0
        %v667 = vsel %vm591, %v588, 0
        %v670 = vsel %vm591, %v590, 0
        %672 = vmatprep.subr.mxu0 0.0
        %673 = vmatpush1.xpose.msra.mxu0 %v670
        %674 = vmatprep.subr.mxu0 0.0
        %675 = vmatpush1.xpose.msra.mxu0 0.0
        %676 = vmatprep.subr.mxu0 0.0
        %677 = vmatpush1.xpose.msra.mxu0 0.0
        %678 = vmatprep.subr.mxu0 0.0
        %679 = vmatpush1.xpose.msra.mxu0 0.0
        %680 = vmatprep.subr.mxu0 0.0
        %681 = vmatpush1.xpose.msra.mxu0 0.0
        %682 = vmatprep.subr.mxu0 0.0
        %683 = vmatpush1.xpose.msra.mxu0 0.0
        %684 = vmatprep.subr.mxu0 0.0
        %685 = vmatpush1.xpose.msra.mxu0 0.0
        %686 = vmatprep.subr.mxu0 0.0
        %687 = vmatpush1.xpose.msra.mxu0 0.0
        %688 = vmatprep.subr.mxu0 0.0
        %689 = vmatpush1.xpose.msra.mxu0 0.0
        %690 = vmatprep.subr.mxu0 0.0
        %691 = vmatpush1.xpose.msra.mxu0 0.0
        %692 = vmatprep.subr.mxu0 0.0
        %693 = vmatpush1.xpose.msra.mxu0 0.0
        %694 = vmatprep.subr.mxu0 0.0
        %695 = vmatpush1.xpose.msra.mxu0 0.0
        %696 = vmatprep.subr.mxu0 0.0
        %697 = vmatpush1.xpose.msra.mxu0 0.0
        %698 = vmatprep.subr.mxu0 0.0
        %699 = vmatpush1.xpose.msra.mxu0 0.0
        %700 = vmatprep.subr.mxu0 0.0
        %701 = vmatpush1.xpose.msra.mxu0 0.0
        %702 = vmatprep.subr.mxu0 0.0
        %703 = vmatpush1.xpose.msra.mxu0 0.0
        %704 = vmatprep.subr.mxu0 0.0
        %705 = vmatpush1.xpose.msra.mxu0 0.0
        %706 = vmatprep.subr.mxu0 0.0
        %707 = vmatpush1.xpose.msra.mxu0 0.0
        %708 = vmatprep.subr.mxu0 0.0
        %709 = vmatpush1.xpose.msra.mxu0 0.0
        %710 = vmatprep.subr.mxu0 0.0
        %711 = vmatpush1.xpose.msra.mxu0 0.0
        %712 = vmatprep.subr.mxu0 0.0
        %713 = vmatpush1.xpose.msra.mxu0 0.0
        %714 = vmatprep.subr.mxu0 0.0
        %715 = vmatpush1.xpose.msra.mxu0 0.0
        %716 = vmatprep.subr.mxu0 0.0
        %717 = vmatpush1.xpose.msra.mxu0 0.0
        %718 = vmatprep.subr.mxu0 0.0
        %719 = vmatpush1.xpose.msra.mxu0 0.0
        %720 = vmatprep.subr.mxu0 0.0
        %721 = vmatpush1.xpose.msra.mxu0 0.0
        %722 = vmatprep.subr.mxu0 0.0
        %723 = vmatpush1.xpose.msra.mxu0 0.0
        %724 = vmatprep.subr.mxu0 0.0
        %725 = vmatpush1.xpose.msra.mxu0 0.0
        %726 = vmatprep.subr.mxu0 0.0
        %727 = vmatpush1.xpose.msra.mxu0 0.0
        %728 = vmatprep.subr.mxu0 0.0
        %729 = vmatpush1.xpose.msra.mxu0 0.0
        %730 = vmatprep.subr.mxu0 0.0
        %731 = vmatpush1.xpose.msra.mxu0 0.0
        %732 = vmatprep.subr.mxu0 0.0
        %733 = vmatpush1.xpose.msra.mxu0 0.0
        %734 = vmatprep.subr.mxu0 0.0
        %735 = vmatpush1.xpose.msra.mxu0 0.0
        %736 = vmatprep.mubr.f32.mxu0 0.0
        %737 = vmatmul.mubr.f32.gmra.mrb[0].mxu0 %v667
        %v738 = vpop.f32.mrb[0].mxu0
        %v739 = vadd.f32 0.0, %v738
        %v740 = vpop.f32.mrb[0].mxu0
        %741 = vdwg.mxu0
        %v742 = vsel %vm512, %v664, -inf
        %743 = vmax.xlane.f32.xlu0 %v742
        %v744 = vpop.xlane.xlu0 %743
        %v745 = vsel %vm512, %v739, -inf
        %746 = vmax.xlane.f32.xlu0 %v745
        %v747 = vpop.xlane.xlu0 %746
        %v748 = vsub.f32 %v664, %v744
        %v749 = vsub.f32 %v739, %v747
        %v750 = vmul.f32 %v748, 1.442695
        %v751 = vpow.pop %v750
        %v752 = vmul.f32 %v749, 1.442695
        %v753 = vpow.pop %v752
        %v754 = vsel %vm512, %v751, 0.0
        %755 = vadd.xlane.f32.xlu0 %v754
        %v756 = vpop.xlane.xlu0 %755
        %v757 = vsel %vm512, %v753, 0.0
        %758 = vadd.xlane.f32.xlu0 %v757
        %v759 = vpop.xlane.xlu0 %758
        %v760 = vld [vmem:[#allocation3] sm:$0xff]
        %v761 = vld [vmem:[#allocation3 + $0x8] sm:$0xff]
        %v763 = vsel %vm512, %v751, 0
        %765 = vmatprep.subr.mxu0 0.0
        %766 = vmatpush1.msra.mxu0 %v760
        %767 = vmatprep.subr.mxu0 0.0
        %768 = vmatpush1.msra.mxu0 0.0
        %769 = vmatprep.subr.mxu0 0.0
        %770 = vmatpush1.msra.mxu0 0.0
        %771 = vmatprep.subr.mxu0 0.0
        %772 = vmatpush1.msra.mxu0 0.0
        %773 = vmatprep.subr.mxu0 0.0
        %774 = vmatpush1.msra.mxu0 0.0
        %775 = vmatprep.subr.mxu0 0.0
        %776 = vmatpush1.msra.mxu0 0.0
        %777 = vmatprep.subr.mxu0 0.0
        %778 = vmatpush1.msra.mxu0 0.0
        %779 = vmatprep.subr.mxu0 0.0
        %780 = vmatpush1.msra.mxu0 0.0
        %781 = vmatprep.subr.mxu0 0.0
        %782 = vmatpush1.msra.mxu0 0.0
        %783 = vmatprep.subr.mxu0 0.0
        %784 = vmatpush1.msra.mxu0 0.0
        %785 = vmatprep.subr.mxu0 0.0
        %786 = vmatpush1.msra.mxu0 0.0
        %787 = vmatprep.subr.mxu0 0.0
        %788 = vmatpush1.msra.mxu0 0.0
        %789 = vmatprep.subr.mxu0 0.0
        %790 = vmatpush1.msra.mxu0 0.0
        %791 = vmatprep.subr.mxu0 0.0
        %792 = vmatpush1.msra.mxu0 0.0
        %793 = vmatprep.subr.mxu0 0.0
        %794 = vmatpush1.msra.mxu0 0.0
        %795 = vmatprep.subr.mxu0 0.0
        %796 = vmatpush1.msra.mxu0 0.0
        %797 = vmatprep.subr.mxu0 0.0
        %798 = vmatpush1.msra.mxu0 0.0
        %799 = vmatprep.subr.mxu0 0.0
        %800 = vmatpush1.msra.mxu0 0.0
        %801 = vmatprep.subr.mxu0 0.0
        %802 = vmatpush1.msra.mxu0 0.0
        %803 = vmatprep.subr.mxu0 0.0
        %804 = vmatpush1.msra.mxu0 0.0
        %805 = vmatprep.subr.mxu0 0.0
        %806 = vmatpush1.msra.mxu0 0.0
        %807 = vmatprep.subr.mxu0 0.0
        %808 = vmatpush1.msra.mxu0 0.0
        %809 = vmatprep.subr.mxu0 0.0
        %810 = vmatpush1.msra.mxu0 0.0
        %811 = vmatprep.subr.mxu0 0.0
        %812 = vmatpush1.msra.mxu0 0.0
        %813 = vmatprep.subr.mxu0 0.0
        %814 = vmatpush1.msra.mxu0 0.0
        %815 = vmatprep.subr.mxu0 0.0
        %816 = vmatpush1.msra.mxu0 0.0
        %817 = vmatprep.subr.mxu0 0.0
        %818 = vmatpush1.msra.mxu0 0.0
        %819 = vmatprep.subr.mxu0 0.0
        %820 = vmatpush1.msra.mxu0 0.0
        %821 = vmatprep.subr.mxu0 0.0
        %822 = vmatpush1.msra.mxu0 0.0
        %823 = vmatprep.subr.mxu0 0.0
        %824 = vmatpush1.msra.mxu0 0.0
        %825 = vmatprep.subr.mxu0 0.0
        %826 = vmatpush1.msra.mxu0 0.0
        %827 = vmatprep.subr.mxu0 0.0
        %828 = vmatpush1.msra.mxu0 0.0
        %829 = vmatprep.mubr.f32.mxu0 0.0
        %830 = vmatmul.mubr.f32.gmra.mrb[0].mxu0 %v763
        %v831 = vpop.f32.mrb[0].mxu0
        %v832 = vadd.f32 0.0, %v831
        %v833 = vpop.f32.mrb[0].mxu0
        %834 = vdwg.mxu0
        %v836 = vsel %vm512, %v753, 0
        %838 = vmatprep.subr.mxu0 0.0
        %839 = vmatpush1.msra.mxu0 %v761
        %840 = vmatprep.subr.mxu0 0.0
        %841 = vmatpush1.msra.mxu0 0.0
        %842 = vmatprep.subr.mxu0 0.0
        %843 = vmatpush1.msra.mxu0 0.0
        %844 = vmatprep.subr.mxu0 0.0
        %845 = vmatpush1.msra.mxu0 0.0
        %846 = vmatprep.subr.mxu0 0.0
        %847 = vmatpush1.msra.mxu0 0.0
        %848 = vmatprep.subr.mxu0 0.0
        %849 = vmatpush1.msra.mxu0 0.0
        %850 = vmatprep.subr.mxu0 0.0
        %851 = vmatpush1.msra.mxu0 0.0
        %852 = vmatprep.subr.mxu0 0.0
        %853 = vmatpush1.msra.mxu0 0.0
        %854 = vmatprep.subr.mxu0 0.0
        %855 = vmatpush1.msra.mxu0 0.0
        %856 = vmatprep.subr.mxu0 0.0
        %857 = vmatpush1.msra.mxu0 0.0
        %858 = vmatprep.subr.mxu0 0.0
        %859 = vmatpush1.msra.mxu0 0.0
        %860 = vmatprep.subr.mxu0 0.0
        %861 = vmatpush1.msra.mxu0 0.0
        %862 = vmatprep.subr.mxu0 0.0
        %863 = vmatpush1.msra.mxu0 0.0
        %864 = vmatprep.subr.mxu0 0.0
        %865 = vmatpush1.msra.mxu0 0.0
        %866 = vmatprep.subr.mxu0 0.0
        %867 = vmatpush1.msra.mxu0 0.0
        %868 = vmatprep.subr.mxu0 0.0
        %869 = vmatpush1.msra.mxu0 0.0
        %870 = vmatprep.subr.mxu0 0.0
        %871 = vmatpush1.msra.mxu0 0.0
        %872 = vmatprep.subr.mxu0 0.0
        %873 = vmatpush1.msra.mxu0 0.0
        %874 = vmatprep.subr.mxu0 0.0
        %875 = vmatpush1.msra.mxu0 0.0
        %876 = vmatprep.subr.mxu0 0.0
        %877 = vmatpush1.msra.mxu0 0.0
        %878 = vmatprep.subr.mxu0 0.0
        %879 = vmatpush1.msra.mxu0 0.0
        %880 = vmatprep.subr.mxu0 0.0
        %881 = vmatpush1.msra.mxu0 0.0
        %882 = vmatprep.subr.mxu0 0.0
        %883 = vmatpush1.msra.mxu0 0.0
        %884 = vmatprep.subr.mxu0 0.0
        %885 = vmatpush1.msra.mxu0 0.0
        %886 = vmatprep.subr.mxu0 0.0
        %887 = vmatpush1.msra.mxu0 0.0
        %888 = vmatprep.subr.mxu0 0.0
        %889 = vmatpush1.msra.mxu0 0.0
        %890 = vmatprep.subr.mxu0 0.0
        %891 = vmatpush1.msra.mxu0 0.0
        %892 = vmatprep.subr.mxu0 0.0
        %893 = vmatpush1.msra.mxu0 0.0
        %894 = vmatprep.subr.mxu0 0.0
        %895 = vmatpush1.msra.mxu0 0.0
        %896 = vmatprep.subr.mxu0 0.0
        %897 = vmatpush1.msra.mxu0 0.0
        %898 = vmatprep.subr.mxu0 0.0
        %899 = vmatpush1.msra.mxu0 0.0
        %900 = vmatprep.subr.mxu0 0.0
        %901 = vmatpush1.msra.mxu0 0.0
        %902 = vmatprep.mubr.f32.mxu0 0.0
        %903 = vmatmul.mubr.f32.gmra.mrb[0].mxu0 %v836
        %v904 = vpop.f32.mrb[0].mxu0
        %v905 = vadd.f32 0.0, %v904
        %v906 = vpop.f32.mrb[0].mxu0
        %907 = vdwg.mxu0
        %v908 = vrcp.pop %v756
        %v909 = vrcp.pop %v759
        %v910 = vmul.f32 %v832, %v908
        %v911 = vmul.f32 %v905, %v909
        %913 = vrot.lane.b32.xlu0 %v911, 4
        %v914 = vpop.permute.xlu0 %913
        %v916 = vsel %vm591, %v910, %v914
        %v917 = vld [vmem:[%s5] sm:$0xff]
        %v919 = vsel %vm512, %v916, 0
        %921 = vmatprep.subr.mxu0 0.0
        %922 = vmatpush1.msra.mxu0 %v917
        %923 = vmatprep.subr.mxu0 0.0
        %924 = vmatpush1.msra.mxu0 0.0
        %925 = vmatprep.subr.mxu0 0.0
        %926 = vmatpush1.msra.mxu0 0.0
        %927 = vmatprep.subr.mxu0 0.0
        %928 = vmatpush1.msra.mxu0 0.0
        %929 = vmatprep.subr.mxu0 0.0
        %930 = vmatpush1.msra.mxu0 0.0
        %931 = vmatprep.subr.mxu0 0.0
        %932 = vmatpush1.msra.mxu0 0.0
        %933 = vmatprep.subr.mxu0 0.0
        %934 = vmatpush1.msra.mxu0 0.0
        %935 = vmatprep.subr.mxu0 0.0
        %936 = vmatpush1.msra.mxu0 0.0
        %937 = vmatprep.subr.mxu0 0.0
        %938 = vmatpush1.msra.mxu0 0.0
        %939 = vmatprep.subr.mxu0 0.0
        %940 = vmatpush1.msra.mxu0 0.0
        %941 = vmatprep.subr.mxu0 0.0
        %942 = vmatpush1.msra.mxu0 0.0
        %943 = vmatprep.subr.mxu0 0.0
        %944 = vmatpush1.msra.mxu0 0.0
        %945 = vmatprep.subr.mxu0 0.0
        %946 = vmatpush1.msra.mxu0 0.0
        %947 = vmatprep.subr.mxu0 0.0
        %948 = vmatpush1.msra.mxu0 0.0
        %949 = vmatprep.subr.mxu0 0.0
        %950 = vmatpush1.msra.mxu0 0.0
        %951 = vmatprep.subr.mxu0 0.0
        %952 = vmatpush1.msra.mxu0 0.0
        %953 = vmatprep.subr.mxu0 0.0
        %954 = vmatpush1.msra.mxu0 0.0
        %955 = vmatprep.subr.mxu0 0.0
        %956 = vmatpush1.msra.mxu0 0.0
        %957 = vmatprep.subr.mxu0 0.0
        %958 = vmatpush1.msra.mxu0 0.0
        %959 = vmatprep.subr.mxu0 0.0
        %960 = vmatpush1.msra.mxu0 0.0
        %961 = vmatprep.subr.mxu0 0.0
        %962 = vmatpush1.msra.mxu0 0.0
        %963 = vmatprep.subr.mxu0 0.0
        %964 = vmatpush1.msra.mxu0 0.0
        %965 = vmatprep.subr.mxu0 0.0
        %966 = vmatpush1.msra.mxu0 0.0
        %967 = vmatprep.subr.mxu0 0.0
        %968 = vmatpush1.msra.mxu0 0.0
        %969 = vmatprep.subr.mxu0 0.0
        %970 = vmatpush1.msra.mxu0 0.0
        %971 = vmatprep.subr.mxu0 0.0
        %972 = vmatpush1.msra.mxu0 0.0
        %973 = vmatprep.subr.mxu0 0.0
        %974 = vmatpush1.msra.mxu0 0.0
        %975 = vmatprep.subr.mxu0 0.0
        %976 = vmatpush1.msra.mxu0 0.0
        %977 = vmatprep.subr.mxu0 0.0
        %978 = vmatpush1.msra.mxu0 0.0
        %979 = vmatprep.subr.mxu0 0.0
        %980 = vmatpush1.msra.mxu0 0.0
        %981 = vmatprep.subr.mxu0 0.0
        %982 = vmatpush1.msra.mxu0 0.0
        %983 = vmatprep.subr.mxu0 0.0
        %984 = vmatpush1.msra.mxu0 0.0
        %985 = vmatprep.mubr.f32.mxu0 0.0
        %986 = vmatmul.mubr.f32.gmra.mrb[0].mxu0 %v919
        %v987 = vpop.f32.mrb[0].mxu0
        %v988 = vadd.f32 0.0, %v987
        %v989 = vpop.f32.mrb[0].mxu0
        %990 = vdwg.mxu0
        %v991 = vadd.f32 %v510, %v988
        %992 = vst.msk [vmem:[%s345] sm:$0xff] %vm512, %v991
        %s993 = sand.u32 %s187, 1
        %s994 = scalar_lea.sflag [#allocation6], %s993
        %s995 = sand.u32 %s187, 1
        %s996 = smul.addr %s995, 8
        %s997 = scalar_lea.vmem [#allocation12], %s996
        // Predicated region
        $region65: #{tpu_custom_call.1} parent=43 // pred_check
          %p998 = pneg %p197
        $region66: #{tpu_custom_call.1} parent=43 // pred_check_branch
          %1000 = sbr.rel (%p998) target = $region68
        $region67: #{tpu_custom_call.1} parent=43 // pred_region
          %s1002 = ssub.s32 128, 128
          %1003 = vsyncadd %s994, %s1002
          %s1004 = sadd.s32 %s32, %s31
          %s1005 = smul.addr %s1004, 128
          %s1006 = scalar_lea.hbm %s6, %s1005
          %s1008 = sshll.u32 %s997, 4
          %s1009 = int_to_ptr.vmem [resolvable:$true] %s1008
          %1011 = dma.vmem_to_hbm [thread:$0]  %s1009, 128, %s1006, %s994
        $region68: #{tpu_custom_call.1} parent=43 // pred_fallthru
          _
      $region44: #{tpu_custom_call.1} parent=5 // pred_fallthru
        _
      %p1012 = scmp.le.s32.totalorder 2, %s22
      // Predicated region
      $region69: #{tpu_custom_call.1} parent=5 // pred_check
        %p1013 = pneg %p1012
      $region70: #{tpu_custom_call.1} parent=5 // pred_check_branch
        %1015 = sbr.rel (%p1013) target = $region72
      $region71: #{tpu_custom_call.1} parent=5 // pred_region
        %s1016 = ssub.s32 %s22, 2
        // Predicated region
        $region73: #{tpu_custom_call.1} parent=71 // pred_check
          %p1017 = pneg %p203
        $region74: #{tpu_custom_call.1} parent=71 // pred_check_branch
          %1019 = sbr.rel (%p1017) target = $region76
        $region75: #{tpu_custom_call.1} parent=71 // pred_region
          %s1020 = sand.u32 %s188, 1
          %s1021 = scalar_lea.sflag [#allocation6], %s1020
          %s1022 = sand.u32 %s188, 1
          %s1023 = smul.addr %s1022, 8
          %s1024 = scalar_lea.vmem [#allocation12], %s1023
          %1025 = dma.done %s1021, 128
        $region76: #{tpu_custom_call.1} parent=71 // pred_fallthru
          _
      $region72: #{tpu_custom_call.1} parent=5 // pred_fallthru
        _
    $region6: #{tpu_custom_call.1} parent=1 // loop_footer
      %s26 = sadd.s32 1, %s22
    $region7: #{tpu_custom_call.1} parent=1 // loop_footer_branch
      %21 = sbr.rel target = $region3
    $region8: #{tpu_custom_call.1} parent=1 // loop_exit
      _
    %1026 = vsyncpa [#allocation5], 1
    %s1027 = scalar_lea.sflag [#allocation5], 1
    %1028 = vsyncpa %s1027, 1
    %1029 = vsyncpa [#allocation8], 1
    %s1030 = scalar_lea.sflag [#allocation8], 1
    %1031 = vsyncpa %s1030, 1
    %1032 = vsyncpa [#allocation11], 1
    %1033 = vsyncpa [#allocation6], 1
    %s1034 = scalar_lea.sflag [#allocation6], 1
    %1035 = vsyncpa %s1034, 1

</llo_original>
